<compile_context>
chip_gen: v6e
topology: v6e:2x2x1
jax: 0.10.0
libtpu: 0.0.40
codegen_flags: <defaults>
</compile_context>

<pallas_src>
import functools

import jax
import jax.numpy as jnp
import numpy as np
from jax.experimental import pallas as pl
from jax.experimental.pallas import tpu as pltpu


def _round_up(x, m):
    return ((x + m - 1) // m) * m


def _pad_gate_cols(w, H, Hp):
    """Zero-pad the trailing 4*H axis to 4*Hp, independently per gate (i,f,g,o)."""
    if Hp == H:
        return w
    lead = w.shape[:-1]
    w4 = w.reshape(lead + (4, H))
    w4 = jnp.pad(w4, [(0, 0)] * len(lead) + [(0, 0), (0, Hp - H)])
    return w4.reshape(lead + (4 * Hp,))


# ---------------------------------------------------------------------------
# Kernel 1: sequential LSTM recurrence.  Per step only h_prev @ W_hh plus the
# precomputed per-token gate inputs.  h/c state and the (single-buffered) W_hh
# live in VMEM scratch across grid iterations; grid iterates time blocks.
# ---------------------------------------------------------------------------
def _lstm_recurrence_kernel(gin_ref, whh_hbm, h_out_ref,
                            whh_sc, h_sc, c_sc, dma_sem,
                            *, hidden_dim, t_block):
    tb = pl.program_id(0)

    @pl.when(tb == 0)
    def _():
        # Time-invariant weight: copy HBM -> VMEM exactly once (no double buffer).
        cp = pltpu.make_async_copy(whh_hbm, whh_sc, dma_sem)
        cp.start()
        cp.wait()
        h_sc[...] = jnp.zeros_like(h_sc)
        c_sc[...] = jnp.zeros_like(c_sc)

    Hp = hidden_dim
    w_hh = whh_sc[...]                                    # (Hp, 4Hp), resident

    # Statically unrolled time loop (T_BLK = 8 keeps live vregs modest).
    for tt in range(t_block):
        h_prev = h_sc[...]                                # (Bp, Hp)
        c_prev = c_sc[...]
        gates = gin_ref[tt] + jnp.dot(h_prev, w_hh,
                                      preferred_element_type=jnp.float32)
        # PyTorch LSTM gate order i, f, g, o -- slices lane-aligned (Hp = 128k).
        i_g = jax.nn.sigmoid(gates[:, 0 * Hp:1 * Hp])
        f_g = jax.nn.sigmoid(gates[:, 1 * Hp:2 * Hp])
        g_g = jnp.tanh(gates[:, 2 * Hp:3 * Hp])
        o_g = jax.nn.sigmoid(gates[:, 3 * Hp:4 * Hp])

        c_new = f_g * c_prev + i_g * g_g
        h_new = o_g * jnp.tanh(c_new)

        c_sc[...] = c_new
        h_sc[...] = h_new
        h_out_ref[tt] = h_new.astype(h_out_ref.dtype)


# ---------------------------------------------------------------------------
# Kernel 2: vocab projection.  Hidden activations resident, grid over vocab
# tiles only -> W_fc streamed from HBM exactly once.  bf16 inputs, f32 accum.
# ---------------------------------------------------------------------------
def _fc_kernel(h_ref, w_ref, b_ref, o_ref):
    o_ref[...] = (jnp.dot(h_ref[...], w_ref[...],
                          preferred_element_type=jnp.float32)
                  + b_ref[...]).astype(o_ref.dtype)


def caption_model_forward(feats, caps, params):
    """feats: (B, F) float32, caps: (B, T) int32 -> logits (B, T, V)."""
    embed_table = params["embed"]        # (V, E)
    w_ih = params["w_ih"]                # (D, 4H)  (already transposed, D=F+E)
    w_hh = params["w_hh"]                # (H, 4H)
    b = params["b"]                      # (1, 4H)  (b_ih + b_hh)
    w_fc = params["w_fc"]                # (H, V)
    b_fc = params["b_fc"]                # (1, V)

    B, T = caps.shape
    F = feats.shape[1]
    H = w_hh.shape[0]
    V = w_fc.shape[1]

    # ---- tile-aligned padded dims ----
    T_BLK = 8                            # fixed timesteps per grid step
    Bp = _round_up(B, 8)                 # sublane alignment
    Hp = _round_up(H, 128)               # lane alignment (gate slices on lanes)
    Vp = _round_up(V, 512)               # vocab padded to full VT tiles
    Tp = _round_up(T, T_BLK)
    G = 4 * Hp

    # ---- pad parameters (per-gate padding on the 4H axis, zero rows/cols) ----
    w_ih_p = _pad_gate_cols(w_ih, H, Hp)                                   # (D, G)
    b_p = _pad_gate_cols(b, H, Hp)                                         # (1, G)
    w_hh_p = _pad_gate_cols(jnp.pad(w_hh, ((0, Hp - H), (0, 0))), H, Hp)   # (Hp, G)
    w_fc_p = jnp.pad(w_fc, ((0, Hp - H), (0, Vp - V))).astype(jnp.bfloat16)  # (Hp, Vp)
    b_fc_p = jnp.pad(b_fc, ((0, 0), (0, Vp - V)))                          # (1, Vp)

    # ---- hoisted input projection (no time dependence), TIME-MAJOR output ----
    gates_const = feats @ w_ih_p[:F] + b_p                                 # (B, G)
    embeds_tm = jnp.take(embed_table, caps.T, axis=0)                      # (T, B, E)
    gates_in_tm = (jnp.einsum('tbe,eg->tbg', embeds_tm, w_ih_p[F:])
                   + gates_const[None, :, :])                              # (T, B, G)
    gates_in_tm = jnp.pad(gates_in_tm,
                          ((0, Tp - T), (0, Bp - B), (0, 0)))              # (Tp, Bp, G)

    # ---- sequential recurrence kernel ----
    rec_kernel = functools.partial(_lstm_recurrence_kernel,
                                   hidden_dim=Hp, t_block=T_BLK)
    h_tm = pl.pallas_call(
        rec_kernel,
        out_shape=jax.ShapeDtypeStruct((Tp, Bp, Hp), jnp.float32),
        grid_spec=pltpu.PrefetchScalarGridSpec(
            num_scalar_prefetch=0,
            grid=(Tp // T_BLK,),
            in_specs=[
                pl.BlockSpec((T_BLK, Bp, G), lambda tb: (tb, 0, 0)),  # gate inputs
                pl.BlockSpec(memory_space=pl.ANY),                    # W_hh (raw HBM)
            ],
            out_specs=pl.BlockSpec((T_BLK, Bp, Hp), lambda tb: (tb, 0, 0)),
            scratch_shapes=[
                pltpu.VMEM((Hp, G), jnp.float32),    # resident W_hh (single buffer)
                pltpu.VMEM((Bp, Hp), jnp.float32),   # h state
                pltpu.VMEM((Bp, Hp), jnp.float32),   # c state
                pltpu.SemaphoreType.DMA(()),         # one-shot W_hh copy
            ],
        ),
        compiler_params=pltpu.CompilerParams(
            dimension_semantics=("arbitrary",),      # sequential recurrence
            vmem_limit_bytes=48 * 1024 * 1024,
        ),
    )(gates_in_tm, w_hh_p)

    # ---- drop padded timesteps/rows; reorder only the small H-wide tensor ----
    h_bt = jnp.transpose(h_tm[:T], (1, 0, 2))[:B].reshape(B * T, Hp)       # (B*T, Hp)
    R = B * T
    Rp = _round_up(R, 128)               # fill MXU rows; resident-h M dimension
    if Rp != R:
        h_bt = jnp.pad(h_bt, ((0, Rp - R), (0, 0)))
    h_bt = h_bt.astype(jnp.bfloat16)

    # ---- vocab projection: resident activations, one pass over W_fc ----
    # TODO(synk): for very large B*T (resident h >> VMEM) re-tile the row axis.
    VT = 512
    logits = pl.pallas_call(
        _fc_kernel,
        out_shape=jax.ShapeDtypeStruct((Rp, Vp), jnp.float32),
        grid_spec=pltpu.PrefetchScalarGridSpec(
            num_scalar_prefetch=0,
            grid=(Vp // VT,),
            in_specs=[
                pl.BlockSpec((Rp, Hp), lambda v: (0, 0)),   # resident hidden rows
                pl.BlockSpec((Hp, VT), lambda v: (0, v)),   # W_fc tile (1 HBM pass)
                pl.BlockSpec((1, VT), lambda v: (0, v)),    # b_fc tile
            ],
            out_specs=pl.BlockSpec((Rp, VT), lambda v: (0, v)),
        ),
        compiler_params=pltpu.CompilerParams(
            dimension_semantics=("parallel",),              # megacore-shardable
            vmem_limit_bytes=48 * 1024 * 1024,
        ),
    )(h_bt, w_fc_p, b_fc_p)

    # Logits already in batch_first row order -- no transpose of the big tensor.
    return logits[:R, :V].reshape(B, T, V)


def make_params(key, feat_dim, embed_dim, hidden_dim, vocab_size):
    """Deterministic synthetic parameters (PyTorch-equivalent shapes)."""
    D = feat_dim + embed_dim
    ks = jax.random.split(key, 7)
    s = 1.0 / np.sqrt(hidden_dim)
    uni = lambda k, shape: jax.random.uniform(k, shape, jnp.float32, -s, s)
    # PyTorch weight_ih_l0: (4H, D), weight_hh_l0: (4H, H); we store transposed.
    w_ih = uni(ks[0], (4 * hidden_dim, D)).T
    w_hh = uni(ks[1], (4 * hidden_dim, hidden_dim)).T
    b_ih = uni(ks[2], (4 * hidden_dim,))
    b_hh = uni(ks[3], (4 * hidden_dim,))
    w_fc = uni(ks[4], (vocab_size, hidden_dim)).T
    b_fc = uni(ks[5], (vocab_size,))
    embed = jax.random.normal(ks[6], (vocab_size, embed_dim), jnp.float32)
    return {
        "embed": embed,
        "w_ih": jnp.asarray(w_ih),
        "w_hh": jnp.asarray(w_hh),
        "b": (b_ih + b_hh)[None, :],
        "w_fc": jnp.asarray(w_fc),
        "b_fc": b_fc[None, :],
    }


def reference_forward(feats, caps, params):
    """Pure-JAX f32 reference matching torch.nn.LSTM semantics (gate order i,f,g,o)."""
    embed_table = params["embed"]
    B, T = caps.shape
    F = feats.shape[1]
    H = params["w_hh"].shape[0]
    embeds = jnp.take(embed_table, caps, axis=0)
    feats_b = jnp.broadcast_to(feats[:, None, :], (B, T, F))
    x = jnp.concatenate([feats_b, embeds], axis=2)

    def step(carry, x_t):
        h, c = carry
        gates = x_t @ params["w_ih"] + h @ params["w_hh"] + params["b"]
        i = jax.nn.sigmoid(gates[:, :H])
        f = jax.nn.sigmoid(gates[:, H:2 * H])
        g = jnp.tanh(gates[:, 2 * H:3 * H])
        o = jax.nn.sigmoid(gates[:, 3 * H:])
        c_new = f * c + i * g
        h_new = o * jnp.tanh(c_new)
        return (h_new, c_new), h_new

    h0 = jnp.zeros((B, H), jnp.float32)
    c0 = jnp.zeros((B, H), jnp.float32)
    _, hs = jax.lax.scan(step, (h0, c0), jnp.transpose(x, (1, 0, 2)))
    out = jnp.transpose(hs, (1, 0, 2)) @ params["w_fc"] + params["b_fc"]
    return out


if __name__ == "__main__":
    feat_dim, embed_dim, hidden_dim, vocab_size = 8, 8, 32, 64
    B, T = 2, 8

    key = jax.random.PRNGKey(0)
    k_params, k_feats, k_caps = jax.random.split(key, 3)

    params = make_params(k_params, feat_dim, embed_dim, hidden_dim, vocab_size)
    feats = jax.random.normal(k_feats, (B, feat_dim), jnp.float32)
    caps = jax.random.randint(k_caps, (B, T), 0, vocab_size, jnp.int32)

    out = jax.block_until_ready(caption_model_forward(feats, caps, params))
    ref = jax.block_until_ready(reference_forward(feats, caps, params))

    # bf16 MXU inputs on the FC (f32 accumulation) -> tolerance loosened vs f32.
    np.testing.assert_allclose(np.asarray(out), np.asarray(ref),
                               rtol=2e-2, atol=2e-2)
    assert out.shape == (B, T, vocab_size)

    print("KERNEL_OK")
</pallas_src>

<mosaic_0001>
module attributes {stable_mosaic.version = 11 : i64} {
  func.func @_lstm_recurrence_kernel(%arg0: i32, %arg1: memref<8x8x512xf32, #tpu.memory_space<vmem>>, %arg2: memref<128x512xf32, #tpu.memory_space<any>>, %arg3: memref<8x8x128xf32, #tpu.memory_space<vmem>>, %arg4: memref<128x512xf32, #tpu.memory_space<vmem>>, %arg5: memref<8x128xf32, #tpu.memory_space<vmem>>, %arg6: memref<8x128xf32, #tpu.memory_space<vmem>>, %arg7: memref<!tpu.dma_semaphore, #tpu.memory_space<semaphore_mem>>) attributes {dimension_semantics = [#tpu.dimension_semantics<arbitrary>], iteration_bounds = array<i64: 1>, scalar_prefetch = 0 : i64, scratch_operands = 4 : i64, tpu.core_type = #tpu.core_type<tc>, window_params = [{transform_indices = @transform_0, window_bounds = array<i64: 8, 8, 512>}, {}, {transform_indices = @transform_2, window_bounds = array<i64: 8, 8, 128>}]} {
    %c0_i32 = arith.constant 0 : i32
    %0 = arith.cmpi eq, %arg0, %c0_i32 : i32
    %1 = arith.extui %0 : i1 to i32
    %c0_i32_0 = arith.constant 0 : i32
    %2 = arith.cmpi ne, %1, %c0_i32_0 : i32
    scf.if %2 {
      tpu.enqueue_dma source(%arg2 : memref<128x512xf32, #tpu.memory_space<any>>) target(%arg4 : memref<128x512xf32, #tpu.memory_space<vmem>>) target_semaphore(%arg7 : memref<!tpu.dma_semaphore, #tpu.memory_space<semaphore_mem>>)
      tpu.wait_dma2 semaphore(%arg7 : memref<!tpu.dma_semaphore, #tpu.memory_space<semaphore_mem>>) src(%arg2 : memref<128x512xf32, #tpu.memory_space<any>>) dst(%arg4 : memref<128x512xf32, #tpu.memory_space<vmem>>)
      %cst_138 = arith.constant 0.000000e+00 : f32
      %292 = vector.broadcast %cst_138 : f32 to vector<8x128xf32>
      %c0_139 = arith.constant 0 : index
      %c0_140 = arith.constant 0 : index
      %293 = vector.load %arg5[%c0_139, %c0_140] : memref<8x128xf32, #tpu.memory_space<vmem>>, vector<8x128xf32>
      tpu.vector_store %arg5[%c0_139, %c0_140], %292 {strides = array<i32>} : memref<8x128xf32, #tpu.memory_space<vmem>>, vector<8x128xf32>,
      %cst_141 = arith.constant 0.000000e+00 : f32
      %294 = vector.broadcast %cst_141 : f32 to vector<8x128xf32>
      %c0_142 = arith.constant 0 : index
      %c0_143 = arith.constant 0 : index
      %295 = vector.load %arg6[%c0_142, %c0_143] : memref<8x128xf32, #tpu.memory_space<vmem>>, vector<8x128xf32>
      tpu.vector_store %arg6[%c0_142, %c0_143], %294 {strides = array<i32>} : memref<8x128xf32, #tpu.memory_space<vmem>>, vector<8x128xf32>,
    } else {
    }
    %c0 = arith.constant 0 : index
    %c0_1 = arith.constant 0 : index
    %3 = vector.load %arg4[%c0, %c0_1] : memref<128x512xf32, #tpu.memory_space<vmem>>, vector<128x512xf32>
    %c0_2 = arith.constant 0 : index
    %c0_3 = arith.constant 0 : index
    %4 = vector.load %arg5[%c0_2, %c0_3] : memref<8x128xf32, #tpu.memory_space<vmem>>, vector<8x128xf32>
    %c0_4 = arith.constant 0 : index
    %c0_5 = arith.constant 0 : index
    %5 = vector.load %arg6[%c0_4, %c0_5] : memref<8x128xf32, #tpu.memory_space<vmem>>, vector<8x128xf32>
    %c0_6 = arith.constant 0 : index
    %c0_7 = arith.constant 0 : index
    %c0_8 = arith.constant 0 : index
    %6 = vector.load %arg1[%c0_6, %c0_7, %c0_8] : memref<8x8x512xf32, #tpu.memory_space<vmem>>, vector<1x8x512xf32>
    %7 = vector.shape_cast %6 : vector<1x8x512xf32> to vector<8x512xf32>
    %cst = arith.constant dense<0.000000e+00> : vector<8x512xf32>
    %8 = tpu.matmul %4, %3, %cst {dimension_numbers = #tpu.dot_dimension_numbers<[1], [0], [0], [1], [0, 0, 1, 1], [], []>} : vector<8x128xf32>, vector<128x512xf32>, vector<8x512xf32> -> vector<8x512xf32>
    %9 = arith.addf %7, %8 : vector<8x512xf32>
    %10 = vector.extract_strided_slice %9 {offsets = [0, 0], sizes = [8, 128], strides = [1, 1]} : vector<8x512xf32> to vector<8x128xf32>
    %11 = arith.negf %10 : vector<8x128xf32>
    %12 = math.exp %11 : vector<8x128xf32>
    %cst_9 = arith.constant 1.000000e+00 : f32
    %13 = vector.broadcast %cst_9 : f32 to vector<8x128xf32>
    %14 = arith.addf %13, %12 : vector<8x128xf32>
    %15 = arith.divf %13, %14 : vector<8x128xf32>
    %16 = vector.extract_strided_slice %9 {offsets = [0, 128], sizes = [8, 128], strides = [1, 1]} : vector<8x512xf32> to vector<8x128xf32>
    %17 = arith.negf %16 : vector<8x128xf32>
    %18 = math.exp %17 : vector<8x128xf32>
    %cst_10 = arith.constant 1.000000e+00 : f32
    %19 = vector.broadcast %cst_10 : f32 to vector<8x128xf32>
    %20 = arith.addf %19, %18 : vector<8x128xf32>
    %21 = arith.divf %19, %20 : vector<8x128xf32>
    %22 = vector.extract_strided_slice %9 {offsets = [0, 256], sizes = [8, 128], strides = [1, 1]} : vector<8x512xf32> to vector<8x128xf32>
    %23 = math.tanh %22 : vector<8x128xf32>
    %24 = vector.extract_strided_slice %9 {offsets = [0, 384], sizes = [8, 128], strides = [1, 1]} : vector<8x512xf32> to vector<8x128xf32>
    %25 = arith.negf %24 : vector<8x128xf32>
    %26 = math.exp %25 : vector<8x128xf32>
    %cst_11 = arith.constant 1.000000e+00 : f32
    %27 = vector.broadcast %cst_11 : f32 to vector<8x128xf32>
    %28 = arith.addf %27, %26 : vector<8x128xf32>
    %29 = arith.divf %27, %28 : vector<8x128xf32>
    %30 = arith.mulf %21, %5 : vector<8x128xf32>
    %31 = arith.mulf %15, %23 : vector<8x128xf32>
    %32 = arith.addf %30, %31 : vector<8x128xf32>
    %33 = math.tanh %32 : vector<8x128xf32>
    %34 = arith.mulf %29, %33 : vector<8x128xf32>
    %c0_12 = arith.constant 0 : index
    %c0_13 = arith.constant 0 : index
    %35 = vector.load %arg6[%c0_12, %c0_13] : memref<8x128xf32, #tpu.memory_space<vmem>>, vector<8x128xf32>
    tpu.vector_store %arg6[%c0_12, %c0_13], %32 {strides = array<i32>} : memref<8x128xf32, #tpu.memory_space<vmem>>, vector<8x128xf32>,
    %c0_14 = arith.constant 0 : index
    %c0_15 = arith.constant 0 : index
    %36 = vector.load %arg5[%c0_14, %c0_15] : memref<8x128xf32, #tpu.memory_space<vmem>>, vector<8x128xf32>
    tpu.vector_store %arg5[%c0_14, %c0_15], %34 {strides = array<i32>} : memref<8x128xf32, #tpu.memory_space<vmem>>, vector<8x128xf32>,
    %c0_16 = arith.constant 0 : index
    %c0_17 = arith.constant 0 : index
    %c0_18 = arith.constant 0 : index
    %37 = vector.load %arg3[%c0_16, %c0_17, %c0_18] : memref<8x8x128xf32, #tpu.memory_space<vmem>>, vector<1x8x128xf32>
    %38 = vector.shape_cast %37 : vector<1x8x128xf32> to vector<8x128xf32>
    %39 = vector.shape_cast %34 : vector<8x128xf32> to vector<1x8x128xf32>
    tpu.vector_store %arg3[%c0_16, %c0_17, %c0_18], %39 {strides = array<i32>} : memref<8x8x128xf32, #tpu.memory_space<vmem>>, vector<1x8x128xf32>,
    %c0_19 = arith.constant 0 : index
    %c0_20 = arith.constant 0 : index
    %40 = vector.load %arg5[%c0_19, %c0_20] : memref<8x128xf32, #tpu.memory_space<vmem>>, vector<8x128xf32>
    %c0_21 = arith.constant 0 : index
    %c0_22 = arith.constant 0 : index
    %41 = vector.load %arg6[%c0_21, %c0_22] : memref<8x128xf32, #tpu.memory_space<vmem>>, vector<8x128xf32>
    %c1 = arith.constant 1 : index
    %c0_23 = arith.constant 0 : index
    %c0_24 = arith.constant 0 : index
    %42 = vector.load %arg1[%c1, %c0_23, %c0_24] : memref<8x8x512xf32, #tpu.memory_space<vmem>>, vector<1x8x512xf32>
    %43 = vector.shape_cast %42 : vector<1x8x512xf32> to vector<8x512xf32>
    %cst_25 = arith.constant dense<0.000000e+00> : vector<8x512xf32>
    %44 = tpu.matmul %40, %3, %cst_25 {dimension_numbers = #tpu.dot_dimension_numbers<[1], [0], [0], [1], [0, 0, 1, 1], [], []>} : vector<8x128xf32>, vector<128x512xf32>, vector<8x512xf32> -> vector<8x512xf32>
    %45 = arith.addf %43, %44 : vector<8x512xf32>
    %46 = vector.extract_strided_slice %45 {offsets = [0, 0], sizes = [8, 128], strides = [1, 1]} : vector<8x512xf32> to vector<8x128xf32>
    %47 = arith.negf %46 : vector<8x128xf32>
    %48 = math.exp %47 : vector<8x128xf32>
    %cst_26 = arith.constant 1.000000e+00 : f32
    %49 = vector.broadcast %cst_26 : f32 to vector<8x128xf32>
    %50 = arith.addf %49, %48 : vector<8x128xf32>
    %51 = arith.divf %49, %50 : vector<8x128xf32>
    %52 = vector.extract_strided_slice %45 {offsets = [0, 128], sizes = [8, 128], strides = [1, 1]} : vector<8x512xf32> to vector<8x128xf32>
    %53 = arith.negf %52 : vector<8x128xf32>
    %54 = math.exp %53 : vector<8x128xf32>
    %cst_27 = arith.constant 1.000000e+00 : f32
    %55 = vector.broadcast %cst_27 : f32 to vector<8x128xf32>
    %56 = arith.addf %55, %54 : vector<8x128xf32>
    %57 = arith.divf %55, %56 : vector<8x128xf32>
    %58 = vector.extract_strided_slice %45 {offsets = [0, 256], sizes = [8, 128], strides = [1, 1]} : vector<8x512xf32> to vector<8x128xf32>
    %59 = math.tanh %58 : vector<8x128xf32>
    %60 = vector.extract_strided_slice %45 {offsets = [0, 384], sizes = [8, 128], strides = [1, 1]} : vector<8x512xf32> to vector<8x128xf32>
    %61 = arith.negf %60 : vector<8x128xf32>
    %62 = math.exp %61 : vector<8x128xf32>
    %cst_28 = arith.constant 1.000000e+00 : f32
    %63 = vector.broadcast %cst_28 : f32 to vector<8x128xf32>
    %64 = arith.addf %63, %62 : vector<8x128xf32>
    %65 = arith.divf %63, %64 : vector<8x128xf32>
    %66 = arith.mulf %57, %41 : vector<8x128xf32>
    %67 = arith.mulf %51, %59 : vector<8x128xf32>
    %68 = arith.addf %66, %67 : vector<8x128xf32>
    %69 = math.tanh %68 : vector<8x128xf32>
    %70 = arith.mulf %65, %69 : vector<8x128xf32>
    %c0_29 = arith.constant 0 : index
    %c0_30 = arith.constant 0 : index
    %71 = vector.load %arg6[%c0_29, %c0_30] : memref<8x128xf32, #tpu.memory_space<vmem>>, vector<8x128xf32>
    tpu.vector_store %arg6[%c0_29, %c0_30], %68 {strides = array<i32>} : memref<8x128xf32, #tpu.memory_space<vmem>>, vector<8x128xf32>,
    %c0_31 = arith.constant 0 : index
    %c0_32 = arith.constant 0 : index
    %72 = vector.load %arg5[%c0_31, %c0_32] : memref<8x128xf32, #tpu.memory_space<vmem>>, vector<8x128xf32>
    tpu.vector_store %arg5[%c0_31, %c0_32], %70 {strides = array<i32>} : memref<8x128xf32, #tpu.memory_space<vmem>>, vector<8x128xf32>,
    %c1_33 = arith.constant 1 : index
    %c0_34 = arith.constant 0 : index
    %c0_35 = arith.constant 0 : index
    %73 = vector.load %arg3[%c1_33, %c0_34, %c0_35] : memref<8x8x128xf32, #tpu.memory_space<vmem>>, vector<1x8x128xf32>
    %74 = vector.shape_cast %73 : vector<1x8x128xf32> to vector<8x128xf32>
    %75 = vector.shape_cast %70 : vector<8x128xf32> to vector<1x8x128xf32>
    tpu.vector_store %arg3[%c1_33, %c0_34, %c0_35], %75 {strides = array<i32>} : memref<8x8x128xf32, #tpu.memory_space<vmem>>, vector<1x8x128xf32>,
    %c0_36 = arith.constant 0 : index
    %c0_37 = arith.constant 0 : index
    %76 = vector.load %arg5[%c0_36, %c0_37] : memref<8x128xf32, #tpu.memory_space<vmem>>, vector<8x128xf32>
    %c0_38 = arith.constant 0 : index
    %c0_39 = arith.constant 0 : index
    %77 = vector.load %arg6[%c0_38, %c0_39] : memref<8x128xf32, #tpu.memory_space<vmem>>, vector<8x128xf32>
    %c2 = arith.constant 2 : index
    %c0_40 = arith.constant 0 : index
    %c0_41 = arith.constant 0 : index
    %78 = vector.load %arg1[%c2, %c0_40, %c0_41] : memref<8x8x512xf32, #tpu.memory_space<vmem>>, vector<1x8x512xf32>
    %79 = vector.shape_cast %78 : vector<1x8x512xf32> to vector<8x512xf32>
    %cst_42 = arith.constant dense<0.000000e+00> : vector<8x512xf32>
    %80 = tpu.matmul %76, %3, %cst_42 {dimension_numbers = #tpu.dot_dimension_numbers<[1], [0], [0], [1], [0, 0, 1, 1], [], []>} : vector<8x128xf32>, vector<128x512xf32>, vector<8x512xf32> -> vector<8x512xf32>
    %81 = arith.addf %79, %80 : vector<8x512xf32>
    %82 = vector.extract_strided_slice %81 {offsets = [0, 0], sizes = [8, 128], strides = [1, 1]} : vector<8x512xf32> to vector<8x128xf32>
    %83 = arith.negf %82 : vector<8x128xf32>
    %84 = math.exp %83 : vector<8x128xf32>
    %cst_43 = arith.constant 1.000000e+00 : f32
    %85 = vector.broadcast %cst_43 : f32 to vector<8x128xf32>
    %86 = arith.addf %85, %84 : vector<8x128xf32>
    %87 = arith.divf %85, %86 : vector<8x128xf32>
    %88 = vector.extract_strided_slice %81 {offsets = [0, 128], sizes = [8, 128], strides = [1, 1]} : vector<8x512xf32> to vector<8x128xf32>
    %89 = arith.negf %88 : vector<8x128xf32>
    %90 = math.exp %89 : vector<8x128xf32>
    %cst_44 = arith.constant 1.000000e+00 : f32
    %91 = vector.broadcast %cst_44 : f32 to vector<8x128xf32>
    %92 = arith.addf %91, %90 : vector<8x128xf32>
    %93 = arith.divf %91, %92 : vector<8x128xf32>
    %94 = vector.extract_strided_slice %81 {offsets = [0, 256], sizes = [8, 128], strides = [1, 1]} : vector<8x512xf32> to vector<8x128xf32>
    %95 = math.tanh %94 : vector<8x128xf32>
    %96 = vector.extract_strided_slice %81 {offsets = [0, 384], sizes = [8, 128], strides = [1, 1]} : vector<8x512xf32> to vector<8x128xf32>
    %97 = arith.negf %96 : vector<8x128xf32>
    %98 = math.exp %97 : vector<8x128xf32>
    %cst_45 = arith.constant 1.000000e+00 : f32
    %99 = vector.broadcast %cst_45 : f32 to vector<8x128xf32>
    %100 = arith.addf %99, %98 : vector<8x128xf32>
    %101 = arith.divf %99, %100 : vector<8x128xf32>
    %102 = arith.mulf %93, %77 : vector<8x128xf32>
    %103 = arith.mulf %87, %95 : vector<8x128xf32>
    %104 = arith.addf %102, %103 : vector<8x128xf32>
    %105 = math.tanh %104 : vector<8x128xf32>
    %106 = arith.mulf %101, %105 : vector<8x128xf32>
    %c0_46 = arith.constant 0 : index
    %c0_47 = arith.constant 0 : index
    %107 = vector.load %arg6[%c0_46, %c0_47] : memref<8x128xf32, #tpu.memory_space<vmem>>, vector<8x128xf32>
    tpu.vector_store %arg6[%c0_46, %c0_47], %104 {strides = array<i32>} : memref<8x128xf32, #tpu.memory_space<vmem>>, vector<8x128xf32>,
    %c0_48 = arith.constant 0 : index
    %c0_49 = arith.constant 0 : index
    %108 = vector.load %arg5[%c0_48, %c0_49] : memref<8x128xf32, #tpu.memory_space<vmem>>, vector<8x128xf32>
    tpu.vector_store %arg5[%c0_48, %c0_49], %106 {strides = array<i32>} : memref<8x128xf32, #tpu.memory_space<vmem>>, vector<8x128xf32>,
    %c2_50 = arith.constant 2 : index
    %c0_51 = arith.constant 0 : index
    %c0_52 = arith.constant 0 : index
    %109 = vector.load %arg3[%c2_50, %c0_51, %c0_52] : memref<8x8x128xf32, #tpu.memory_space<vmem>>, vector<1x8x128xf32>
    %110 = vector.shape_cast %109 : vector<1x8x128xf32> to vector<8x128xf32>
    %111 = vector.shape_cast %106 : vector<8x128xf32> to vector<1x8x128xf32>
    tpu.vector_store %arg3[%c2_50, %c0_51, %c0_52], %111 {strides = array<i32>} : memref<8x8x128xf32, #tpu.memory_space<vmem>>, vector<1x8x128xf32>,
    %c0_53 = arith.constant 0 : index
    %c0_54 = arith.constant 0 : index
    %112 = vector.load %arg5[%c0_53, %c0_54] : memref<8x128xf32, #tpu.memory_space<vmem>>, vector<8x128xf32>
    %c0_55 = arith.constant 0 : index
    %c0_56 = arith.constant 0 : index
    %113 = vector.load %arg6[%c0_55, %c0_56] : memref<8x128xf32, #tpu.memory_space<vmem>>, vector<8x128xf32>
    %c3 = arith.constant 3 : index
    %c0_57 = arith.constant 0 : index
    %c0_58 = arith.constant 0 : index
    %114 = vector.load %arg1[%c3, %c0_57, %c0_58] : memref<8x8x512xf32, #tpu.memory_space<vmem>>, vector<1x8x512xf32>
    %115 = vector.shape_cast %114 : vector<1x8x512xf32> to vector<8x512xf32>
    %cst_59 = arith.constant dense<0.000000e+00> : vector<8x512xf32>
    %116 = tpu.matmul %112, %3, %cst_59 {dimension_numbers = #tpu.dot_dimension_numbers<[1], [0], [0], [1], [0, 0, 1, 1], [], []>} : vector<8x128xf32>, vector<128x512xf32>, vector<8x512xf32> -> vector<8x512xf32>
    %117 = arith.addf %115, %116 : vector<8x512xf32>
    %118 = vector.extract_strided_slice %117 {offsets = [0, 0], sizes = [8, 128], strides = [1, 1]} : vector<8x512xf32> to vector<8x128xf32>
    %119 = arith.negf %118 : vector<8x128xf32>
    %120 = math.exp %119 : vector<8x128xf32>
    %cst_60 = arith.constant 1.000000e+00 : f32
    %121 = vector.broadcast %cst_60 : f32 to vector<8x128xf32>
    %122 = arith.addf %121, %120 : vector<8x128xf32>
    %123 = arith.divf %121, %122 : vector<8x128xf32>
    %124 = vector.extract_strided_slice %117 {offsets = [0, 128], sizes = [8, 128], strides = [1, 1]} : vector<8x512xf32> to vector<8x128xf32>
    %125 = arith.negf %124 : vector<8x128xf32>
    %126 = math.exp %125 : vector<8x128xf32>
    %cst_61 = arith.constant 1.000000e+00 : f32
    %127 = vector.broadcast %cst_61 : f32 to vector<8x128xf32>
    %128 = arith.addf %127, %126 : vector<8x128xf32>
    %129 = arith.divf %127, %128 : vector<8x128xf32>
    %130 = vector.extract_strided_slice %117 {offsets = [0, 256], sizes = [8, 128], strides = [1, 1]} : vector<8x512xf32> to vector<8x128xf32>
    %131 = math.tanh %130 : vector<8x128xf32>
    %132 = vector.extract_strided_slice %117 {offsets = [0, 384], sizes = [8, 128], strides = [1, 1]} : vector<8x512xf32> to vector<8x128xf32>
    %133 = arith.negf %132 : vector<8x128xf32>
    %134 = math.exp %133 : vector<8x128xf32>
    %cst_62 = arith.constant 1.000000e+00 : f32
    %135 = vector.broadcast %cst_62 : f32 to vector<8x128xf32>
    %136 = arith.addf %135, %134 : vector<8x128xf32>
    %137 = arith.divf %135, %136 : vector<8x128xf32>
    %138 = arith.mulf %129, %113 : vector<8x128xf32>
    %139 = arith.mulf %123, %131 : vector<8x128xf32>
    %140 = arith.addf %138, %139 : vector<8x128xf32>
    %141 = math.tanh %140 : vector<8x128xf32>
    %142 = arith.mulf %137, %141 : vector<8x128xf32>
    %c0_63 = arith.constant 0 : index
    %c0_64 = arith.constant 0 : index
    %143 = vector.load %arg6[%c0_63, %c0_64] : memref<8x128xf32, #tpu.memory_space<vmem>>, vector<8x128xf32>
    tpu.vector_store %arg6[%c0_63, %c0_64], %140 {strides = array<i32>} : memref<8x128xf32, #tpu.memory_space<vmem>>, vector<8x128xf32>,
    %c0_65 = arith.constant 0 : index
    %c0_66 = arith.constant 0 : index
    %144 = vector.load %arg5[%c0_65, %c0_66] : memref<8x128xf32, #tpu.memory_space<vmem>>, vector<8x128xf32>
    tpu.vector_store %arg5[%c0_65, %c0_66], %142 {strides = array<i32>} : memref<8x128xf32, #tpu.memory_space<vmem>>, vector<8x128xf32>,
    %c3_67 = arith.constant 3 : index
    %c0_68 = arith.constant 0 : index
    %c0_69 = arith.constant 0 : index
    %145 = vector.load %arg3[%c3_67, %c0_68, %c0_69] : memref<8x8x128xf32, #tpu.memory_space<vmem>>, vector<1x8x128xf32>
    %146 = vector.shape_cast %145 : vector<1x8x128xf32> to vector<8x128xf32>
    %147 = vector.shape_cast %142 : vector<8x128xf32> to vector<1x8x128xf32>
    tpu.vector_store %arg3[%c3_67, %c0_68, %c0_69], %147 {strides = array<i32>} : memref<8x8x128xf32, #tpu.memory_space<vmem>>, vector<1x8x128xf32>,
    %c0_70 = arith.constant 0 : index
    %c0_71 = arith.constant 0 : index
    %148 = vector.load %arg5[%c0_70, %c0_71] : memref<8x128xf32, #tpu.memory_space<vmem>>, vector<8x128xf32>
    %c0_72 = arith.constant 0 : index
    %c0_73 = arith.constant 0 : index
    %149 = vector.load %arg6[%c0_72, %c0_73] : memref<8x128xf32, #tpu.memory_space<vmem>>, vector<8x128xf32>
    %c4 = arith.constant 4 : index
    %c0_74 = arith.constant 0 : index
    %c0_75 = arith.constant 0 : index
    %150 = vector.load %arg1[%c4, %c0_74, %c0_75] : memref<8x8x512xf32, #tpu.memory_space<vmem>>, vector<1x8x512xf32>
    %151 = vector.shape_cast %150 : vector<1x8x512xf32> to vector<8x512xf32>
    %cst_76 = arith.constant dense<0.000000e+00> : vector<8x512xf32>
    %152 = tpu.matmul %148, %3, %cst_76 {dimension_numbers = #tpu.dot_dimension_numbers<[1], [0], [0], [1], [0, 0, 1, 1], [], []>} : vector<8x128xf32>, vector<128x512xf32>, vector<8x512xf32> -> vector<8x512xf32>
    %153 = arith.addf %151, %152 : vector<8x512xf32>
    %154 = vector.extract_strided_slice %153 {offsets = [0, 0], sizes = [8, 128], strides = [1, 1]} : vector<8x512xf32> to vector<8x128xf32>
    %155 = arith.negf %154 : vector<8x128xf32>
    %156 = math.exp %155 : vector<8x128xf32>
    %cst_77 = arith.constant 1.000000e+00 : f32
    %157 = vector.broadcast %cst_77 : f32 to vector<8x128xf32>
    %158 = arith.addf %157, %156 : vector<8x128xf32>
    %159 = arith.divf %157, %158 : vector<8x128xf32>
    %160 = vector.extract_strided_slice %153 {offsets = [0, 128], sizes = [8, 128], strides = [1, 1]} : vector<8x512xf32> to vector<8x128xf32>
    %161 = arith.negf %160 : vector<8x128xf32>
    %162 = math.exp %161 : vector<8x128xf32>
    %cst_78 = arith.constant 1.000000e+00 : f32
    %163 = vector.broadcast %cst_78 : f32 to vector<8x128xf32>
    %164 = arith.addf %163, %162 : vector<8x128xf32>
    %165 = arith.divf %163, %164 : vector<8x128xf32>
    %166 = vector.extract_strided_slice %153 {offsets = [0, 256], sizes = [8, 128], strides = [1, 1]} : vector<8x512xf32> to vector<8x128xf32>
    %167 = math.tanh %166 : vector<8x128xf32>
    %168 = vector.extract_strided_slice %153 {offsets = [0, 384], sizes = [8, 128], strides = [1, 1]} : vector<8x512xf32> to vector<8x128xf32>
    %169 = arith.negf %168 : vector<8x128xf32>
    %170 = math.exp %169 : vector<8x128xf32>
    %cst_79 = arith.constant 1.000000e+00 : f32
    %171 = vector.broadcast %cst_79 : f32 to vector<8x128xf32>
    %172 = arith.addf %171, %170 : vector<8x128xf32>
    %173 = arith.divf %171, %172 : vector<8x128xf32>
    %174 = arith.mulf %165, %149 : vector<8x128xf32>
    %175 = arith.mulf %159, %167 : vector<8x128xf32>
    %176 = arith.addf %174, %175 : vector<8x128xf32>
    %177 = math.tanh %176 : vector<8x128xf32>
    %178 = arith.mulf %173, %177 : vector<8x128xf32>
    %c0_80 = arith.constant 0 : index
    %c0_81 = arith.constant 0 : index
    %179 = vector.load %arg6[%c0_80, %c0_81] : memref<8x128xf32, #tpu.memory_space<vmem>>, vector<8x128xf32>
    tpu.vector_store %arg6[%c0_80, %c0_81], %176 {strides = array<i32>} : memref<8x128xf32, #tpu.memory_space<vmem>>, vector<8x128xf32>,
    %c0_82 = arith.constant 0 : index
    %c0_83 = arith.constant 0 : index
    %180 = vector.load %arg5[%c0_82, %c0_83] : memref<8x128xf32, #tpu.memory_space<vmem>>, vector<8x128xf32>
    tpu.vector_store %arg5[%c0_82, %c0_83], %178 {strides = array<i32>} : memref<8x128xf32, #tpu.memory_space<vmem>>, vector<8x128xf32>,
    %c4_84 = arith.constant 4 : index
    %c0_85 = arith.constant 0 : index
    %c0_86 = arith.constant 0 : index
    %181 = vector.load %arg3[%c4_84, %c0_85, %c0_86] : memref<8x8x128xf32, #tpu.memory_space<vmem>>, vector<1x8x128xf32>
    %182 = vector.shape_cast %181 : vector<1x8x128xf32> to vector<8x128xf32>
    %183 = vector.shape_cast %178 : vector<8x128xf32> to vector<1x8x128xf32>
    tpu.vector_store %arg3[%c4_84, %c0_85, %c0_86], %183 {strides = array<i32>} : memref<8x8x128xf32, #tpu.memory_space<vmem>>, vector<1x8x128xf32>,
    %c0_87 = arith.constant 0 : index
    %c0_88 = arith.constant 0 : index
    %184 = vector.load %arg5[%c0_87, %c0_88] : memref<8x128xf32, #tpu.memory_space<vmem>>, vector<8x128xf32>
    %c0_89 = arith.constant 0 : index
    %c0_90 = arith.constant 0 : index
    %185 = vector.load %arg6[%c0_89, %c0_90] : memref<8x128xf32, #tpu.memory_space<vmem>>, vector<8x128xf32>
    %c5 = arith.constant 5 : index
    %c0_91 = arith.constant 0 : index
    %c0_92 = arith.constant 0 : index
    %186 = vector.load %arg1[%c5, %c0_91, %c0_92] : memref<8x8x512xf32, #tpu.memory_space<vmem>>, vector<1x8x512xf32>
    %187 = vector.shape_cast %186 : vector<1x8x512xf32> to vector<8x512xf32>
    %cst_93 = arith.constant dense<0.000000e+00> : vector<8x512xf32>
    %188 = tpu.matmul %184, %3, %cst_93 {dimension_numbers = #tpu.dot_dimension_numbers<[1], [0], [0], [1], [0, 0, 1, 1], [], []>} : vector<8x128xf32>, vector<128x512xf32>, vector<8x512xf32> -> vector<8x512xf32>
    %189 = arith.addf %187, %188 : vector<8x512xf32>
    %190 = vector.extract_strided_slice %189 {offsets = [0, 0], sizes = [8, 128], strides = [1, 1]} : vector<8x512xf32> to vector<8x128xf32>
    %191 = arith.negf %190 : vector<8x128xf32>
    %192 = math.exp %191 : vector<8x128xf32>
    %cst_94 = arith.constant 1.000000e+00 : f32
    %193 = vector.broadcast %cst_94 : f32 to vector<8x128xf32>
    %194 = arith.addf %193, %192 : vector<8x128xf32>
    %195 = arith.divf %193, %194 : vector<8x128xf32>
    %196 = vector.extract_strided_slice %189 {offsets = [0, 128], sizes = [8, 128], strides = [1, 1]} : vector<8x512xf32> to vector<8x128xf32>
    %197 = arith.negf %196 : vector<8x128xf32>
    %198 = math.exp %197 : vector<8x128xf32>
    %cst_95 = arith.constant 1.000000e+00 : f32
    %199 = vector.broadcast %cst_95 : f32 to vector<8x128xf32>
    %200 = arith.addf %199, %198 : vector<8x128xf32>
    %201 = arith.divf %199, %200 : vector<8x128xf32>
    %202 = vector.extract_strided_slice %189 {offsets = [0, 256], sizes = [8, 128], strides = [1, 1]} : vector<8x512xf32> to vector<8x128xf32>
    %203 = math.tanh %202 : vector<8x128xf32>
    %204 = vector.extract_strided_slice %189 {offsets = [0, 384], sizes = [8, 128], strides = [1, 1]} : vector<8x512xf32> to vector<8x128xf32>
    %205 = arith.negf %204 : vector<8x128xf32>
    %206 = math.exp %205 : vector<8x128xf32>
    %cst_96 = arith.constant 1.000000e+00 : f32
    %207 = vector.broadcast %cst_96 : f32 to vector<8x128xf32>
    %208 = arith.addf %207, %206 : vector<8x128xf32>
    %209 = arith.divf %207, %208 : vector<8x128xf32>
    %210 = arith.mulf %201, %185 : vector<8x128xf32>
    %211 = arith.mulf %195, %203 : vector<8x128xf32>
    %212 = arith.addf %210, %211 : vector<8x128xf32>
    %213 = math.tanh %212 : vector<8x128xf32>
    %214 = arith.mulf %209, %213 : vector<8x128xf32>
    %c0_97 = arith.constant 0 : index
    %c0_98 = arith.constant 0 : index
    %215 = vector.load %arg6[%c0_97, %c0_98] : memref<8x128xf32, #tpu.memory_space<vmem>>, vector<8x128xf32>
    tpu.vector_store %arg6[%c0_97, %c0_98], %212 {strides = array<i32>} : memref<8x128xf32, #tpu.memory_space<vmem>>, vector<8x128xf32>,
    %c0_99 = arith.constant 0 : index
    %c0_100 = arith.constant 0 : index
    %216 = vector.load %arg5[%c0_99, %c0_100] : memref<8x128xf32, #tpu.memory_space<vmem>>, vector<8x128xf32>
    tpu.vector_store %arg5[%c0_99, %c0_100], %214 {strides = array<i32>} : memref<8x128xf32, #tpu.memory_space<vmem>>, vector<8x128xf32>,
    %c5_101 = arith.constant 5 : index
    %c0_102 = arith.constant 0 : index
    %c0_103 = arith.constant 0 : index
    %217 = vector.load %arg3[%c5_101, %c0_102, %c0_103] : memref<8x8x128xf32, #tpu.memory_space<vmem>>, vector<1x8x128xf32>
    %218 = vector.shape_cast %217 : vector<1x8x128xf32> to vector<8x128xf32>
    %219 = vector.shape_cast %214 : vector<8x128xf32> to vector<1x8x128xf32>
    tpu.vector_store %arg3[%c5_101, %c0_102, %c0_103], %219 {strides = array<i32>} : memref<8x8x128xf32, #tpu.memory_space<vmem>>, vector<1x8x128xf32>,
    %c0_104 = arith.constant 0 : index
    %c0_105 = arith.constant 0 : index
    %220 = vector.load %arg5[%c0_104, %c0_105] : memref<8x128xf32, #tpu.memory_space<vmem>>, vector<8x128xf32>
    %c0_106 = arith.constant 0 : index
    %c0_107 = arith.constant 0 : index
    %221 = vector.load %arg6[%c0_106, %c0_107] : memref<8x128xf32, #tpu.memory_space<vmem>>, vector<8x128xf32>
    %c6 = arith.constant 6 : index
    %c0_108 = arith.constant 0 : index
    %c0_109 = arith.constant 0 : index
    %222 = vector.load %arg1[%c6, %c0_108, %c0_109] : memref<8x8x512xf32, #tpu.memory_space<vmem>>, vector<1x8x512xf32>
    %223 = vector.shape_cast %222 : vector<1x8x512xf32> to vector<8x512xf32>
    %cst_110 = arith.constant dense<0.000000e+00> : vector<8x512xf32>
    %224 = tpu.matmul %220, %3, %cst_110 {dimension_numbers = #tpu.dot_dimension_numbers<[1], [0], [0], [1], [0, 0, 1, 1], [], []>} : vector<8x128xf32>, vector<128x512xf32>, vector<8x512xf32> -> vector<8x512xf32>
    %225 = arith.addf %223, %224 : vector<8x512xf32>
    %226 = vector.extract_strided_slice %225 {offsets = [0, 0], sizes = [8, 128], strides = [1, 1]} : vector<8x512xf32> to vector<8x128xf32>
    %227 = arith.negf %226 : vector<8x128xf32>
    %228 = math.exp %227 : vector<8x128xf32>
    %cst_111 = arith.constant 1.000000e+00 : f32
    %229 = vector.broadcast %cst_111 : f32 to vector<8x128xf32>
    %230 = arith.addf %229, %228 : vector<8x128xf32>
    %231 = arith.divf %229, %230 : vector<8x128xf32>
    %232 = vector.extract_strided_slice %225 {offsets = [0, 128], sizes = [8, 128], strides = [1, 1]} : vector<8x512xf32> to vector<8x128xf32>
    %233 = arith.negf %232 : vector<8x128xf32>
    %234 = math.exp %233 : vector<8x128xf32>
    %cst_112 = arith.constant 1.000000e+00 : f32
    %235 = vector.broadcast %cst_112 : f32 to vector<8x128xf32>
    %236 = arith.addf %235, %234 : vector<8x128xf32>
    %237 = arith.divf %235, %236 : vector<8x128xf32>
    %238 = vector.extract_strided_slice %225 {offsets = [0, 256], sizes = [8, 128], strides = [1, 1]} : vector<8x512xf32> to vector<8x128xf32>
    %239 = math.tanh %238 : vector<8x128xf32>
    %240 = vector.extract_strided_slice %225 {offsets = [0, 384], sizes = [8, 128], strides = [1, 1]} : vector<8x512xf32> to vector<8x128xf32>
    %241 = arith.negf %240 : vector<8x128xf32>
    %242 = math.exp %241 : vector<8x128xf32>
    %cst_113 = arith.constant 1.000000e+00 : f32
    %243 = vector.broadcast %cst_113 : f32 to vector<8x128xf32>
    %244 = arith.addf %243, %242 : vector<8x128xf32>
    %245 = arith.divf %243, %244 : vector<8x128xf32>
    %246 = arith.mulf %237, %221 : vector<8x128xf32>
    %247 = arith.mulf %231, %239 : vector<8x128xf32>
    %248 = arith.addf %246, %247 : vector<8x128xf32>
    %249 = math.tanh %248 : vector<8x128xf32>
    %250 = arith.mulf %245, %249 : vector<8x128xf32>
    %c0_114 = arith.constant 0 : index
    %c0_115 = arith.constant 0 : index
    %251 = vector.load %arg6[%c0_114, %c0_115] : memref<8x128xf32, #tpu.memory_space<vmem>>, vector<8x128xf32>
    tpu.vector_store %arg6[%c0_114, %c0_115], %248 {strides = array<i32>} : memref<8x128xf32, #tpu.memory_space<vmem>>, vector<8x128xf32>,
    %c0_116 = arith.constant 0 : index
    %c0_117 = arith.constant 0 : index
    %252 = vector.load %arg5[%c0_116, %c0_117] : memref<8x128xf32, #tpu.memory_space<vmem>>, vector<8x128xf32>
    tpu.vector_store %arg5[%c0_116, %c0_117], %250 {strides = array<i32>} : memref<8x128xf32, #tpu.memory_space<vmem>>, vector<8x128xf32>,
    %c6_118 = arith.constant 6 : index
    %c0_119 = arith.constant 0 : index
    %c0_120 = arith.constant 0 : index
    %253 = vector.load %arg3[%c6_118, %c0_119, %c0_120] : memref<8x8x128xf32, #tpu.memory_space<vmem>>, vector<1x8x128xf32>
    %254 = vector.shape_cast %253 : vector<1x8x128xf32> to vector<8x128xf32>
    %255 = vector.shape_cast %250 : vector<8x128xf32> to vector<1x8x128xf32>
    tpu.vector_store %arg3[%c6_118, %c0_119, %c0_120], %255 {strides = array<i32>} : memref<8x8x128xf32, #tpu.memory_space<vmem>>, vector<1x8x128xf32>,
    %c0_121 = arith.constant 0 : index
    %c0_122 = arith.constant 0 : index
    %256 = vector.load %arg5[%c0_121, %c0_122] : memref<8x128xf32, #tpu.memory_space<vmem>>, vector<8x128xf32>
    %c0_123 = arith.constant 0 : index
    %c0_124 = arith.constant 0 : index
    %257 = vector.load %arg6[%c0_123, %c0_124] : memref<8x128xf32, #tpu.memory_space<vmem>>, vector<8x128xf32>
    %c7 = arith.constant 7 : index
    %c0_125 = arith.constant 0 : index
    %c0_126 = arith.constant 0 : index
    %258 = vector.load %arg1[%c7, %c0_125, %c0_126] : memref<8x8x512xf32, #tpu.memory_space<vmem>>, vector<1x8x512xf32>
    %259 = vector.shape_cast %258 : vector<1x8x512xf32> to vector<8x512xf32>
    %cst_127 = arith.constant dense<0.000000e+00> : vector<8x512xf32>
    %260 = tpu.matmul %256, %3, %cst_127 {dimension_numbers = #tpu.dot_dimension_numbers<[1], [0], [0], [1], [0, 0, 1, 1], [], []>} : vector<8x128xf32>, vector<128x512xf32>, vector<8x512xf32> -> vector<8x512xf32>
    %261 = arith.addf %259, %260 : vector<8x512xf32>
    %262 = vector.extract_strided_slice %261 {offsets = [0, 0], sizes = [8, 128], strides = [1, 1]} : vector<8x512xf32> to vector<8x128xf32>
    %263 = arith.negf %262 : vector<8x128xf32>
    %264 = math.exp %263 : vector<8x128xf32>
    %cst_128 = arith.constant 1.000000e+00 : f32
    %265 = vector.broadcast %cst_128 : f32 to vector<8x128xf32>
    %266 = arith.addf %265, %264 : vector<8x128xf32>
    %267 = arith.divf %265, %266 : vector<8x128xf32>
    %268 = vector.extract_strided_slice %261 {offsets = [0, 128], sizes = [8, 128], strides = [1, 1]} : vector<8x512xf32> to vector<8x128xf32>
    %269 = arith.negf %268 : vector<8x128xf32>
    %270 = math.exp %269 : vector<8x128xf32>
    %cst_129 = arith.constant 1.000000e+00 : f32
    %271 = vector.broadcast %cst_129 : f32 to vector<8x128xf32>
    %272 = arith.addf %271, %270 : vector<8x128xf32>
    %273 = arith.divf %271, %272 : vector<8x128xf32>
    %274 = vector.extract_strided_slice %261 {offsets = [0, 256], sizes = [8, 128], strides = [1, 1]} : vector<8x512xf32> to vector<8x128xf32>
    %275 = math.tanh %274 : vector<8x128xf32>
    %276 = vector.extract_strided_slice %261 {offsets = [0, 384], sizes = [8, 128], strides = [1, 1]} : vector<8x512xf32> to vector<8x128xf32>
    %277 = arith.negf %276 : vector<8x128xf32>
    %278 = math.exp %277 : vector<8x128xf32>
    %cst_130 = arith.constant 1.000000e+00 : f32
    %279 = vector.broadcast %cst_130 : f32 to vector<8x128xf32>
    %280 = arith.addf %279, %278 : vector<8x128xf32>
    %281 = arith.divf %279, %280 : vector<8x128xf32>
    %282 = arith.mulf %273, %257 : vector<8x128xf32>
    %283 = arith.mulf %267, %275 : vector<8x128xf32>
    %284 = arith.addf %282, %283 : vector<8x128xf32>
    %285 = math.tanh %284 : vector<8x128xf32>
    %286 = arith.mulf %281, %285 : vector<8x128xf32>
    %c0_131 = arith.constant 0 : index
    %c0_132 = arith.constant 0 : index
    %287 = vector.load %arg6[%c0_131, %c0_132] : memref<8x128xf32, #tpu.memory_space<vmem>>, vector<8x128xf32>
    tpu.vector_store %arg6[%c0_131, %c0_132], %284 {strides = array<i32>} : memref<8x128xf32, #tpu.memory_space<vmem>>, vector<8x128xf32>,
    %c0_133 = arith.constant 0 : index
    %c0_134 = arith.constant 0 : index
    %288 = vector.load %arg5[%c0_133, %c0_134] : memref<8x128xf32, #tpu.memory_space<vmem>>, vector<8x128xf32>
    tpu.vector_store %arg5[%c0_133, %c0_134], %286 {strides = array<i32>} : memref<8x128xf32, #tpu.memory_space<vmem>>, vector<8x128xf32>,
    %c7_135 = arith.constant 7 : index
    %c0_136 = arith.constant 0 : index
    %c0_137 = arith.constant 0 : index
    %289 = vector.load %arg3[%c7_135, %c0_136, %c0_137] : memref<8x8x128xf32, #tpu.memory_space<vmem>>, vector<1x8x128xf32>
    %290 = vector.shape_cast %289 : vector<1x8x128xf32> to vector<8x128xf32>
    %291 = vector.shape_cast %286 : vector<8x128xf32> to vector<1x8x128xf32>
    tpu.vector_store %arg3[%c7_135, %c0_136, %c0_137], %291 {strides = array<i32>} : memref<8x8x128xf32, #tpu.memory_space<vmem>>, vector<1x8x128xf32>,
    return
  }
  func.func @transform_0(%arg0: i32) -> (i32, i32, i32) {
    %c0_i32 = arith.constant 0 : i32
    %c0_i32_0 = arith.constant 0 : i32
    %c0_i32_1 = arith.constant 0 : i32
    return %arg0, %c0_i32, %c0_i32_0 : i32, i32, i32
  }
  func.func @transform_2(%arg0: i32) -> (i32, i32, i32) {
    %c0_i32 = arith.constant 0 : i32
    %c0_i32_0 = arith.constant 0 : i32
    %c0_i32_1 = arith.constant 0 : i32
    return %arg0, %c0_i32, %c0_i32_0 : i32, i32, i32
  }
}

</mosaic_0001>

<llo_original>
// kernel: tpu_custom_call.1
$region0: #{tpu_custom_call.1}
  #allocation0 [shape = 'u32[]', space=smem, size = 0x4, offset = 0x4, fixed_abs, tag = 'smem constant byte address 0x4 - core index']
  #allocation1 [shape = 'u32[144,128]{1,0:T(1,128)}', space=vmem, size = 0x12000, scoped, tag = 'internal scratch']
  #allocation2 [shape = 'f32[128,512]{1,0:T(8,128)}', space=vmem, size = 0x40000, scoped, tag = 'scratch operand']
  #allocation3 [shape = 'f32[8,128]{1,0:T(8,128)}', space=vmem, size = 0x1000, scoped, tag = 'scratch operand']
  #allocation4 [shape = 'f32[8,128]{1,0:T(8,128)}', space=vmem, size = 0x1000, scoped, tag = 'scratch operand']
  #allocation5 [shape = 's32[1]{0}', space=sflag, size = 0x4, scoped, tag = 'scratch operand']
  #allocation10 [shape = 's32[]', space=sflag, size = 0x4, offset = 0, fixed_abs, tag = 'sflag constant byte address 0x0 - dummy sync flag']
  #allocation11 [shape = 's32[]', space=sflag, size = 0x4, offset = 0, fixed_abs, tag = 'sflag constant byte address 0x0 - dummy sync flag']
  #allocation12 [shape = 'u32[]', space=smem, size = 0x4, offset = 0x44, fixed_abs, tag = 'smem constant byte address 0x44 - assertion arg 0']
  #allocation13 [shape = 'u32[]', space=smem, size = 0x4, offset = 0x48, fixed_abs, tag = 'smem constant byte address 0x48 - assertion arg 1']
  %s0 = inlined_call_operand.hbm [shape: f32[8,8,512], index: 0, kind: input, shape index: {}]
  %s1 = inlined_call_operand.hbm [shape: f32[128,512], index: 1, kind: input, shape index: {}]
  %s2 = inlined_call_operand.hbm [shape: f32[8,8,128], index: 2, kind: output, shape index: {}]
  %s3 = sld [smem:[#allocation0]]
  $region26: #{tpu_custom_call.1} parent=0
    _
  %s5 = ssub.s32 1, %s3
  %s6 = scalar_select 0, %s5, %s3
  $region1: #{tpu_custom_call.1} parent=0
    #allocation6 [shape = 'u8[131072]{0}', space=vmem, size = 0x20000, scoped, tag = 'input window, operand 0, single buffered']
    #allocation7 [shape = 's32[1]{0}', space=sflag, size = 0x4, scoped, tag = 'scoped memory for tpu_custom_call.1']
    #allocation8 [shape = 's32[1]{0}', space=sflag, size = 0x4, scoped, tag = 'scoped memory for tpu_custom_call.1']
    #allocation9 [shape = 'u8[32768]{0}', space=vmem, size = 0x8000, scoped, tag = 'output window, operand 0, single buffered']
    %7 = vsyncpa [#allocation7], 0
    %8 = vsyncpa [#allocation8], 0
    // Predicated region
    $region2: #{tpu_custom_call.1} parent=1 // pred_check
      _
    $region3: #{tpu_custom_call.1} parent=1 // pred_check_branch
      %10 = sbr.rel (0) target = $region5
    $region4: #{tpu_custom_call.1} parent=1 // pred_region
      %s12 = ssub.s32 4096, 4096
      %13 = vsyncadd [#allocation7], %s12
      %s14 = sshll.u32 [#allocation6], 4
      %s15 = int_to_ptr.vmem [resolvable:$true] %s14
      %20 = dma.hbm_to_vmem [thread:$0]  %s0, 4096, %s15, [#allocation7], 512, 512, 32
    $region5: #{tpu_custom_call.1} parent=1 // pred_fallthru
      _
    // Predicated region
    $region6: #{tpu_custom_call.1} parent=1 // pred_check
      _
    $region7: #{tpu_custom_call.1} parent=1 // pred_check_branch
      %22 = sbr.rel (0) target = $region9
    $region8: #{tpu_custom_call.1} parent=1 // pred_region
      %23 = dma.done [#allocation7], 4096
    $region9: #{tpu_custom_call.1} parent=1 // pred_fallthru
      _
    %p24 = scmp.eq.s32.totalorder 0, 0
    // Predicated region
    $region10: #{tpu_custom_call.1} parent=1 // pred_check
      %p25 = pneg %p24
    $region11: #{tpu_custom_call.1} parent=1 // pred_check_branch
      %27 = sbr.rel (%p25) target = $region13
    $region12: #{tpu_custom_call.1} parent=1 // pred_region
      // Predicated region
      $region14: #{tpu_custom_call.1} parent=12 // pred_check
        _
      $region15: #{tpu_custom_call.1} parent=12 // pred_check_branch
        %29 = sbr.rel target = $region17
      $region16: #{tpu_custom_call.1} parent=12 // pred_region
        %30 = sst [smem:[#allocation12]] [#allocation11]
        %31 = sst [smem:[#allocation13]] [#allocation10]
      $region17: #{tpu_custom_call.1} parent=12 // pred_fallthru
        _
      %33 = shalt.err (0)
      %s35 = sshll.u32 [#allocation2], 4
      %s36 = int_to_ptr.vmem [resolvable:$true] %s35
      %38 = dma.hbm_to_vmem [thread:$0]  %s1, 8192, %s36, [#allocation5]
      %s39 = smul.u32 8, 16
      %s40 = smul.u32 %s39, 4
      %s41 = sshll.u32 %s40, 4
      %42 = dma.done [#allocation5], %s41
      %43 = vst [vmem:[#allocation3] sm:$0xff] 0.0
      %44 = vst [vmem:[#allocation4] sm:$0xff] 0.0
    $region13: #{tpu_custom_call.1} parent=1 // pred_fallthru
      _
    %v45 = vld [vmem:[#allocation2] sm:$0xff]
    %v46 = vld [vmem:[#allocation2 + $0x8] sm:$0xff]
    %v47 = vld [vmem:[#allocation2 + $0x10] sm:$0xff]
    %v48 = vld [vmem:[#allocation2 + $0x18] sm:$0xff]
    %v49 = vld [vmem:[#allocation2 + $0x20] sm:$0xff]
    %v50 = vld [vmem:[#allocation2 + $0x28] sm:$0xff]
    %v51 = vld [vmem:[#allocation2 + $0x30] sm:$0xff]
    %v52 = vld [vmem:[#allocation2 + $0x38] sm:$0xff]
    %v53 = vld [vmem:[#allocation2 + $0x40] sm:$0xff]
    %v54 = vld [vmem:[#allocation2 + $0x48] sm:$0xff]
    %v55 = vld [vmem:[#allocation2 + $0x50] sm:$0xff]
    %v56 = vld [vmem:[#allocation2 + $0x58] sm:$0xff]
    %v57 = vld [vmem:[#allocation2 + $0x60] sm:$0xff]
    %v58 = vld [vmem:[#allocation2 + $0x68] sm:$0xff]
    %v59 = vld [vmem:[#allocation2 + $0x70] sm:$0xff]
    %v60 = vld [vmem:[#allocation2 + $0x78] sm:$0xff]
    %v61 = vld [vmem:[#allocation2 + $0x80] sm:$0xff]
    %v62 = vld [vmem:[#allocation2 + $0x88] sm:$0xff]
    %v63 = vld [vmem:[#allocation2 + $0x90] sm:$0xff]
    %v64 = vld [vmem:[#allocation2 + $0x98] sm:$0xff]
    %v65 = vld [vmem:[#allocation2 + $0xa0] sm:$0xff]
    %v66 = vld [vmem:[#allocation2 + $0xa8] sm:$0xff]
    %v67 = vld [vmem:[#allocation2 + $0xb0] sm:$0xff]
    %v68 = vld [vmem:[#allocation2 + $0xb8] sm:$0xff]
    %v69 = vld [vmem:[#allocation2 + $0xc0] sm:$0xff]
    %v70 = vld [vmem:[#allocation2 + $0xc8] sm:$0xff]
    %v71 = vld [vmem:[#allocation2 + $0xd0] sm:$0xff]
    %v72 = vld [vmem:[#allocation2 + $0xd8] sm:$0xff]
    %v73 = vld [vmem:[#allocation2 + $0xe0] sm:$0xff]
    %v74 = vld [vmem:[#allocation2 + $0xe8] sm:$0xff]
    %v75 = vld [vmem:[#allocation2 + $0xf0] sm:$0xff]
    %v76 = vld [vmem:[#allocation2 + $0xf8] sm:$0xff]
    %v77 = vld [vmem:[#allocation2 + $0x100] sm:$0xff]
    %v78 = vld [vmem:[#allocation2 + $0x108] sm:$0xff]
    %v79 = vld [vmem:[#allocation2 + $0x110] sm:$0xff]
    %v80 = vld [vmem:[#allocation2 + $0x118] sm:$0xff]
    %v81 = vld [vmem:[#allocation2 + $0x120] sm:$0xff]
    %v82 = vld [vmem:[#allocation2 + $0x128] sm:$0xff]
    %v83 = vld [vmem:[#allocation2 + $0x130] sm:$0xff]
    %v84 = vld [vmem:[#allocation2 + $0x138] sm:$0xff]
    %v85 = vld [vmem:[#allocation2 + $0x140] sm:$0xff]
    %v86 = vld [vmem:[#allocation2 + $0x148] sm:$0xff]
    %v87 = vld [vmem:[#allocation2 + $0x150] sm:$0xff]
    %v88 = vld [vmem:[#allocation2 + $0x158] sm:$0xff]
    %v89 = vld [vmem:[#allocation2 + $0x160] sm:$0xff]
    %v90 = vld [vmem:[#allocation2 + $0x168] sm:$0xff]
    %v91 = vld [vmem:[#allocation2 + $0x170] sm:$0xff]
    %v92 = vld [vmem:[#allocation2 + $0x178] sm:$0xff]
    %v93 = vld [vmem:[#allocation2 + $0x180] sm:$0xff]
    %v94 = vld [vmem:[#allocation2 + $0x188] sm:$0xff]
    %v95 = vld [vmem:[#allocation2 + $0x190] sm:$0xff]
    %v96 = vld [vmem:[#allocation2 + $0x198] sm:$0xff]
    %v97 = vld [vmem:[#allocation2 + $0x1a0] sm:$0xff]
    %v98 = vld [vmem:[#allocation2 + $0x1a8] sm:$0xff]
    %v99 = vld [vmem:[#allocation2 + $0x1b0] sm:$0xff]
    %v100 = vld [vmem:[#allocation2 + $0x1b8] sm:$0xff]
    %v101 = vld [vmem:[#allocation2 + $0x1c0] sm:$0xff]
    %v102 = vld [vmem:[#allocation2 + $0x1c8] sm:$0xff]
    %v103 = vld [vmem:[#allocation2 + $0x1d0] sm:$0xff]
    %v104 = vld [vmem:[#allocation2 + $0x1d8] sm:$0xff]
    %v105 = vld [vmem:[#allocation2 + $0x1e0] sm:$0xff]
    %v106 = vld [vmem:[#allocation2 + $0x1e8] sm:$0xff]
    %v107 = vld [vmem:[#allocation2 + $0x1f0] sm:$0xff]
    %v108 = vld [vmem:[#allocation2 + $0x1f8] sm:$0xff]
    %v109 = vld [vmem:[#allocation3] sm:$0xff]
    %v110 = vld [vmem:[#allocation4] sm:$0xff]
    %v111 = vld [vmem:[#allocation6] sm:$0xff]
    %v112 = vld [vmem:[#allocation6 + $0x8] sm:$0xff]
    %v113 = vld [vmem:[#allocation6 + $0x10] sm:$0xff]
    %v114 = vld [vmem:[#allocation6 + $0x18] sm:$0xff]
    %115 = vmatprep.subr.mxu0 %v106
    %116 = vmatpush1.msra.mxu0 %v105
    %117 = vmatprep.subr.mxu0 %v102
    %118 = vmatpush1.msra.mxu0 %v101
    %119 = vmatprep.subr.mxu0 %v98
    %120 = vmatpush1.msra.mxu0 %v97
    %121 = vmatprep.subr.mxu0 %v94
    %122 = vmatpush1.msra.mxu0 %v93
    %123 = vmatprep.subr.mxu0 %v90
    %124 = vmatpush1.msra.mxu0 %v89
    %125 = vmatprep.subr.mxu0 %v86
    %126 = vmatpush1.msra.mxu0 %v85
    %127 = vmatprep.subr.mxu0 %v82
    %128 = vmatpush1.msra.mxu0 %v81
    %129 = vmatprep.subr.mxu0 %v78
    %130 = vmatpush1.msra.mxu0 %v77
    %131 = vmatprep.subr.mxu0 %v74
    %132 = vmatpush1.msra.mxu0 %v73
    %133 = vmatprep.subr.mxu0 %v70
    %134 = vmatpush1.msra.mxu0 %v69
    %135 = vmatprep.subr.mxu0 %v66
    %136 = vmatpush1.msra.mxu0 %v65
    %137 = vmatprep.subr.mxu0 %v62
    %138 = vmatpush1.msra.mxu0 %v61
    %139 = vmatprep.subr.mxu0 %v58
    %140 = vmatpush1.msra.mxu0 %v57
    %141 = vmatprep.subr.mxu0 %v54
    %142 = vmatpush1.msra.mxu0 %v53
    %143 = vmatprep.subr.mxu0 %v50
    %144 = vmatpush1.msra.mxu0 %v49
    %145 = vmatprep.subr.mxu0 %v46
    %146 = vmatpush1.msra.mxu0 %v45
    %147 = vmatprep.subr.mxu0 0.0
    %148 = vmatpush2.msra.mxu0 0.0
    %149 = vmatprep.subr.mxu0 0.0
    %150 = vmatpush2.msra.mxu0 0.0
    %151 = vmatprep.subr.mxu0 0.0
    %152 = vmatpush2.msra.mxu0 0.0
    %153 = vmatprep.subr.mxu0 0.0
    %154 = vmatpush2.msra.mxu0 0.0
    %155 = vmatprep.subr.mxu0 0.0
    %156 = vmatpush2.msra.mxu0 0.0
    %157 = vmatprep.subr.mxu0 0.0
    %158 = vmatpush2.msra.mxu0 0.0
    %159 = vmatprep.subr.mxu0 0.0
    %160 = vmatpush2.msra.mxu0 0.0
    %161 = vmatprep.subr.mxu0 0.0
    %162 = vmatpush2.msra.mxu0 0.0
    %163 = vmatprep.subr.mxu0 0.0
    %164 = vmatpush2.msra.mxu0 0.0
    %165 = vmatprep.subr.mxu0 0.0
    %166 = vmatpush2.msra.mxu0 0.0
    %167 = vmatprep.subr.mxu0 0.0
    %168 = vmatpush2.msra.mxu0 0.0
    %169 = vmatprep.subr.mxu0 0.0
    %170 = vmatpush2.msra.mxu0 0.0
    %171 = vmatprep.subr.mxu0 0.0
    %172 = vmatpush2.msra.mxu0 0.0
    %173 = vmatprep.subr.mxu0 0.0
    %174 = vmatpush2.msra.mxu0 0.0
    %175 = vmatprep.subr.mxu0 0.0
    %176 = vmatpush2.msra.mxu0 0.0
    %177 = vmatprep.subr.mxu0 0.0
    %178 = vmatpush2.msra.mxu0 0.0
    %179 = vmatprep.mubr.f32.mxu0 0.0
    %180 = vmatmul.mubr.f32.gmra.mxu0 %v109
    %v181 = vpop.f32.mrf.mxu0
    %v182 = vadd.f32 0.0, %v181
    %v183 = vpop.f32.mrf.mxu0
    %v184 = vadd.f32 0.0, %v183
    %185 = vdwg.mxu0
    %186 = vmatprep.subr.mxu0 %v108
    %187 = vmatpush1.msra.mxu0 %v107
    %188 = vmatprep.subr.mxu0 %v104
    %189 = vmatpush1.msra.mxu0 %v103
    %190 = vmatprep.subr.mxu0 %v100
    %191 = vmatpush1.msra.mxu0 %v99
    %192 = vmatprep.subr.mxu0 %v96
    %193 = vmatpush1.msra.mxu0 %v95
    %194 = vmatprep.subr.mxu0 %v92
    %195 = vmatpush1.msra.mxu0 %v91
    %196 = vmatprep.subr.mxu0 %v88
    %197 = vmatpush1.msra.mxu0 %v87
    %198 = vmatprep.subr.mxu0 %v84
    %199 = vmatpush1.msra.mxu0 %v83
    %200 = vmatprep.subr.mxu0 %v80
    %201 = vmatpush1.msra.mxu0 %v79
    %202 = vmatprep.subr.mxu0 %v76
    %203 = vmatpush1.msra.mxu0 %v75
    %204 = vmatprep.subr.mxu0 %v72
    %205 = vmatpush1.msra.mxu0 %v71
    %206 = vmatprep.subr.mxu0 %v68
    %207 = vmatpush1.msra.mxu0 %v67
    %208 = vmatprep.subr.mxu0 %v64
    %209 = vmatpush1.msra.mxu0 %v63
    %210 = vmatprep.subr.mxu0 %v60
    %211 = vmatpush1.msra.mxu0 %v59
    %212 = vmatprep.subr.mxu0 %v56
    %213 = vmatpush1.msra.mxu0 %v55
    %214 = vmatprep.subr.mxu0 %v52
    %215 = vmatpush1.msra.mxu0 %v51
    %216 = vmatprep.subr.mxu0 %v48
    %217 = vmatpush1.msra.mxu0 %v47
    %218 = vmatprep.subr.mxu0 0.0
    %219 = vmatpush2.msra.mxu0 0.0
    %220 = vmatprep.subr.mxu0 0.0
    %221 = vmatpush2.msra.mxu0 0.0
    %222 = vmatprep.subr.mxu0 0.0
    %223 = vmatpush2.msra.mxu0 0.0
    %224 = vmatprep.subr.mxu0 0.0
    %225 = vmatpush2.msra.mxu0 0.0
    %226 = vmatprep.subr.mxu0 0.0
    %227 = vmatpush2.msra.mxu0 0.0
    %228 = vmatprep.subr.mxu0 0.0
    %229 = vmatpush2.msra.mxu0 0.0
    %230 = vmatprep.subr.mxu0 0.0
    %231 = vmatpush2.msra.mxu0 0.0
    %232 = vmatprep.subr.mxu0 0.0
    %233 = vmatpush2.msra.mxu0 0.0
    %234 = vmatprep.subr.mxu0 0.0
    %235 = vmatpush2.msra.mxu0 0.0
    %236 = vmatprep.subr.mxu0 0.0
    %237 = vmatpush2.msra.mxu0 0.0
    %238 = vmatprep.subr.mxu0 0.0
    %239 = vmatpush2.msra.mxu0 0.0
    %240 = vmatprep.subr.mxu0 0.0
    %241 = vmatpush2.msra.mxu0 0.0
    %242 = vmatprep.subr.mxu0 0.0
    %243 = vmatpush2.msra.mxu0 0.0
    %244 = vmatprep.subr.mxu0 0.0
    %245 = vmatpush2.msra.mxu0 0.0
    %246 = vmatprep.subr.mxu0 0.0
    %247 = vmatpush2.msra.mxu0 0.0
    %248 = vmatprep.subr.mxu0 0.0
    %249 = vmatpush2.msra.mxu0 0.0
    %250 = vmatprep.mubr.f32.mxu0 0.0
    %251 = vmatmul.mubr.f32.gmra.mxu0 %v109
    %v252 = vpop.f32.mrf.mxu0
    %v253 = vadd.f32 0.0, %v252
    %v254 = vpop.f32.mrf.mxu0
    %v255 = vadd.f32 0.0, %v254
    %256 = vdwg.mxu0
    %v257 = vadd.f32 %v111, %v182
    %v258 = vadd.f32 %v112, %v184
    %v259 = vadd.f32 %v113, %v253
    %v260 = vadd.f32 %v114, %v255
    %v261 = vxor.u32 %v257, 2147483648
    %v262 = vmul.f32 %v261, 1.442695
    %v263 = vpow.pop %v262
    %v264 = vadd.f32 %v263, 1.0
    %v265 = vrcp.pop %v264
    %v266 = vmul.f32 1.0, %v265
    %v267 = vxor.u32 %v258, 2147483648
    %v268 = vmul.f32 %v267, 1.442695
    %v269 = vpow.pop %v268
    %v270 = vadd.f32 %v269, 1.0
    %v271 = vrcp.pop %v270
    %v272 = vmul.f32 1.0, %v271
    %v273 = vtanh.pop %v259
    %v274 = vxor.u32 %v260, 2147483648
    %v275 = vmul.f32 %v274, 1.442695
    %v276 = vpow.pop %v275
    %v277 = vadd.f32 %v276, 1.0
    %v278 = vrcp.pop %v277
    %v279 = vmul.f32 1.0, %v278
    %v280 = vmul.f32 %v272, %v110
    %v281 = vmul.f32 %v266, %v273
    %v282 = vadd.f32 %v280, %v281
    %v283 = vtanh.pop %v282
    %v284 = vmul.f32 %v279, %v283
    %285 = vst [vmem:[#allocation4] sm:$0xff] %v282
    %286 = vst [vmem:[#allocation3] sm:$0xff] %v284
    %287 = vst [vmem:[#allocation9] sm:$0xff] %v284
    %v288 = vld [vmem:[#allocation3] sm:$0xff]
    %v289 = vld [vmem:[#allocation4] sm:$0xff]
    %s290 = scalar_lea.vmem [#allocation6], 32
    %v291 = vld [vmem:[%s290] sm:$0xff]
    %v292 = vld [vmem:[%s290 + $0x8] sm:$0xff]
    %v293 = vld [vmem:[%s290 + $0x10] sm:$0xff]
    %v294 = vld [vmem:[%s290 + $0x18] sm:$0xff]
    %295 = vmatprep.subr.mxu0 %v106
    %296 = vmatpush1.msra.mxu0 %v105
    %297 = vmatprep.subr.mxu0 %v102
    %298 = vmatpush1.msra.mxu0 %v101
    %299 = vmatprep.subr.mxu0 %v98
    %300 = vmatpush1.msra.mxu0 %v97
    %301 = vmatprep.subr.mxu0 %v94
    %302 = vmatpush1.msra.mxu0 %v93
    %303 = vmatprep.subr.mxu0 %v90
    %304 = vmatpush1.msra.mxu0 %v89
    %305 = vmatprep.subr.mxu0 %v86
    %306 = vmatpush1.msra.mxu0 %v85
    %307 = vmatprep.subr.mxu0 %v82
    %308 = vmatpush1.msra.mxu0 %v81
    %309 = vmatprep.subr.mxu0 %v78
    %310 = vmatpush1.msra.mxu0 %v77
    %311 = vmatprep.subr.mxu0 %v74
    %312 = vmatpush1.msra.mxu0 %v73
    %313 = vmatprep.subr.mxu0 %v70
    %314 = vmatpush1.msra.mxu0 %v69
    %315 = vmatprep.subr.mxu0 %v66
    %316 = vmatpush1.msra.mxu0 %v65
    %317 = vmatprep.subr.mxu0 %v62
    %318 = vmatpush1.msra.mxu0 %v61
    %319 = vmatprep.subr.mxu0 %v58
    %320 = vmatpush1.msra.mxu0 %v57
    %321 = vmatprep.subr.mxu0 %v54
    %322 = vmatpush1.msra.mxu0 %v53
    %323 = vmatprep.subr.mxu0 %v50
    %324 = vmatpush1.msra.mxu0 %v49
    %325 = vmatprep.subr.mxu0 %v46
    %326 = vmatpush1.msra.mxu0 %v45
    %327 = vmatprep.subr.mxu0 0.0
    %328 = vmatpush2.msra.mxu0 0.0
    %329 = vmatprep.subr.mxu0 0.0
    %330 = vmatpush2.msra.mxu0 0.0
    %331 = vmatprep.subr.mxu0 0.0
    %332 = vmatpush2.msra.mxu0 0.0
    %333 = vmatprep.subr.mxu0 0.0
    %334 = vmatpush2.msra.mxu0 0.0
    %335 = vmatprep.subr.mxu0 0.0
    %336 = vmatpush2.msra.mxu0 0.0
    %337 = vmatprep.subr.mxu0 0.0
    %338 = vmatpush2.msra.mxu0 0.0
    %339 = vmatprep.subr.mxu0 0.0
    %340 = vmatpush2.msra.mxu0 0.0
    %341 = vmatprep.subr.mxu0 0.0
    %342 = vmatpush2.msra.mxu0 0.0
    %343 = vmatprep.subr.mxu0 0.0
    %344 = vmatpush2.msra.mxu0 0.0
    %345 = vmatprep.subr.mxu0 0.0
    %346 = vmatpush2.msra.mxu0 0.0
    %347 = vmatprep.subr.mxu0 0.0
    %348 = vmatpush2.msra.mxu0 0.0
    %349 = vmatprep.subr.mxu0 0.0
    %350 = vmatpush2.msra.mxu0 0.0
    %351 = vmatprep.subr.mxu0 0.0
    %352 = vmatpush2.msra.mxu0 0.0
    %353 = vmatprep.subr.mxu0 0.0
    %354 = vmatpush2.msra.mxu0 0.0
    %355 = vmatprep.subr.mxu0 0.0
    %356 = vmatpush2.msra.mxu0 0.0
    %357 = vmatprep.subr.mxu0 0.0
    %358 = vmatpush2.msra.mxu0 0.0
    %359 = vmatprep.mubr.f32.mxu0 0.0
    %360 = vmatmul.mubr.f32.gmra.mxu0 %v288
    %v361 = vpop.f32.mrf.mxu0
    %v362 = vadd.f32 0.0, %v361
    %v363 = vpop.f32.mrf.mxu0
    %v364 = vadd.f32 0.0, %v363
    %365 = vdwg.mxu0
    %366 = vmatprep.subr.mxu0 %v108
    %367 = vmatpush1.msra.mxu0 %v107
    %368 = vmatprep.subr.mxu0 %v104
    %369 = vmatpush1.msra.mxu0 %v103
    %370 = vmatprep.subr.mxu0 %v100
    %371 = vmatpush1.msra.mxu0 %v99
    %372 = vmatprep.subr.mxu0 %v96
    %373 = vmatpush1.msra.mxu0 %v95
    %374 = vmatprep.subr.mxu0 %v92
    %375 = vmatpush1.msra.mxu0 %v91
    %376 = vmatprep.subr.mxu0 %v88
    %377 = vmatpush1.msra.mxu0 %v87
    %378 = vmatprep.subr.mxu0 %v84
    %379 = vmatpush1.msra.mxu0 %v83
    %380 = vmatprep.subr.mxu0 %v80
    %381 = vmatpush1.msra.mxu0 %v79
    %382 = vmatprep.subr.mxu0 %v76
    %383 = vmatpush1.msra.mxu0 %v75
    %384 = vmatprep.subr.mxu0 %v72
    %385 = vmatpush1.msra.mxu0 %v71
    %386 = vmatprep.subr.mxu0 %v68
    %387 = vmatpush1.msra.mxu0 %v67
    %388 = vmatprep.subr.mxu0 %v64
    %389 = vmatpush1.msra.mxu0 %v63
    %390 = vmatprep.subr.mxu0 %v60
    %391 = vmatpush1.msra.mxu0 %v59
    %392 = vmatprep.subr.mxu0 %v56
    %393 = vmatpush1.msra.mxu0 %v55
    %394 = vmatprep.subr.mxu0 %v52
    %395 = vmatpush1.msra.mxu0 %v51
    %396 = vmatprep.subr.mxu0 %v48
    %397 = vmatpush1.msra.mxu0 %v47
    %398 = vmatprep.subr.mxu0 0.0
    %399 = vmatpush2.msra.mxu0 0.0
    %400 = vmatprep.subr.mxu0 0.0
    %401 = vmatpush2.msra.mxu0 0.0
    %402 = vmatprep.subr.mxu0 0.0
    %403 = vmatpush2.msra.mxu0 0.0
    %404 = vmatprep.subr.mxu0 0.0
    %405 = vmatpush2.msra.mxu0 0.0
    %406 = vmatprep.subr.mxu0 0.0
    %407 = vmatpush2.msra.mxu0 0.0
    %408 = vmatprep.subr.mxu0 0.0
    %409 = vmatpush2.msra.mxu0 0.0
    %410 = vmatprep.subr.mxu0 0.0
    %411 = vmatpush2.msra.mxu0 0.0
    %412 = vmatprep.subr.mxu0 0.0
    %413 = vmatpush2.msra.mxu0 0.0
    %414 = vmatprep.subr.mxu0 0.0
    %415 = vmatpush2.msra.mxu0 0.0
    %416 = vmatprep.subr.mxu0 0.0
    %417 = vmatpush2.msra.mxu0 0.0
    %418 = vmatprep.subr.mxu0 0.0
    %419 = vmatpush2.msra.mxu0 0.0
    %420 = vmatprep.subr.mxu0 0.0
    %421 = vmatpush2.msra.mxu0 0.0
    %422 = vmatprep.subr.mxu0 0.0
    %423 = vmatpush2.msra.mxu0 0.0
    %424 = vmatprep.subr.mxu0 0.0
    %425 = vmatpush2.msra.mxu0 0.0
    %426 = vmatprep.subr.mxu0 0.0
    %427 = vmatpush2.msra.mxu0 0.0
    %428 = vmatprep.subr.mxu0 0.0
    %429 = vmatpush2.msra.mxu0 0.0
    %430 = vmatprep.mubr.f32.mxu0 0.0
    %431 = vmatmul.mubr.f32.gmra.mxu0 %v288
    %v432 = vpop.f32.mrf.mxu0
    %v433 = vadd.f32 0.0, %v432
    %v434 = vpop.f32.mrf.mxu0
    %v435 = vadd.f32 0.0, %v434
    %436 = vdwg.mxu0
    %v437 = vadd.f32 %v291, %v362
    %v438 = vadd.f32 %v292, %v364
    %v439 = vadd.f32 %v293, %v433
    %v440 = vadd.f32 %v294, %v435
    %v441 = vxor.u32 %v437, 2147483648
    %v442 = vmul.f32 %v441, 1.442695
    %v443 = vpow.pop %v442
    %v444 = vadd.f32 %v443, 1.0
    %v445 = vrcp.pop %v444
    %v446 = vmul.f32 1.0, %v445
    %v447 = vxor.u32 %v438, 2147483648
    %v448 = vmul.f32 %v447, 1.442695
    %v449 = vpow.pop %v448
    %v450 = vadd.f32 %v449, 1.0
    %v451 = vrcp.pop %v450
    %v452 = vmul.f32 1.0, %v451
    %v453 = vtanh.pop %v439
    %v454 = vxor.u32 %v440, 2147483648
    %v455 = vmul.f32 %v454, 1.442695
    %v456 = vpow.pop %v455
    %v457 = vadd.f32 %v456, 1.0
    %v458 = vrcp.pop %v457
    %v459 = vmul.f32 1.0, %v458
    %v460 = vmul.f32 %v452, %v289
    %v461 = vmul.f32 %v446, %v453
    %v462 = vadd.f32 %v460, %v461
    %v463 = vtanh.pop %v462
    %v464 = vmul.f32 %v459, %v463
    %465 = vst [vmem:[#allocation4] sm:$0xff] %v462
    %466 = vst [vmem:[#allocation3] sm:$0xff] %v464
    %s467 = scalar_lea.vmem [#allocation9], 8
    %468 = vst [vmem:[%s467] sm:$0xff] %v464
    %v469 = vld [vmem:[#allocation3] sm:$0xff]
    %v470 = vld [vmem:[#allocation4] sm:$0xff]
    %s471 = scalar_lea.vmem [#allocation6], 64
    %v472 = vld [vmem:[%s471] sm:$0xff]
    %v473 = vld [vmem:[%s471 + $0x8] sm:$0xff]
    %v474 = vld [vmem:[%s471 + $0x10] sm:$0xff]
    %v475 = vld [vmem:[%s471 + $0x18] sm:$0xff]
    %476 = vmatprep.subr.mxu0 %v106
    %477 = vmatpush1.msra.mxu0 %v105
    %478 = vmatprep.subr.mxu0 %v102
    %479 = vmatpush1.msra.mxu0 %v101
    %480 = vmatprep.subr.mxu0 %v98
    %481 = vmatpush1.msra.mxu0 %v97
    %482 = vmatprep.subr.mxu0 %v94
    %483 = vmatpush1.msra.mxu0 %v93
    %484 = vmatprep.subr.mxu0 %v90
    %485 = vmatpush1.msra.mxu0 %v89
    %486 = vmatprep.subr.mxu0 %v86
    %487 = vmatpush1.msra.mxu0 %v85
    %488 = vmatprep.subr.mxu0 %v82
    %489 = vmatpush1.msra.mxu0 %v81
    %490 = vmatprep.subr.mxu0 %v78
    %491 = vmatpush1.msra.mxu0 %v77
    %492 = vmatprep.subr.mxu0 %v74
    %493 = vmatpush1.msra.mxu0 %v73
    %494 = vmatprep.subr.mxu0 %v70
    %495 = vmatpush1.msra.mxu0 %v69
    %496 = vmatprep.subr.mxu0 %v66
    %497 = vmatpush1.msra.mxu0 %v65
    %498 = vmatprep.subr.mxu0 %v62
    %499 = vmatpush1.msra.mxu0 %v61
    %500 = vmatprep.subr.mxu0 %v58
    %501 = vmatpush1.msra.mxu0 %v57
    %502 = vmatprep.subr.mxu0 %v54
    %503 = vmatpush1.msra.mxu0 %v53
    %504 = vmatprep.subr.mxu0 %v50
    %505 = vmatpush1.msra.mxu0 %v49
    %506 = vmatprep.subr.mxu0 %v46
    %507 = vmatpush1.msra.mxu0 %v45
    %508 = vmatprep.subr.mxu0 0.0
    %509 = vmatpush2.msra.mxu0 0.0
    %510 = vmatprep.subr.mxu0 0.0
    %511 = vmatpush2.msra.mxu0 0.0
    %512 = vmatprep.subr.mxu0 0.0
    %513 = vmatpush2.msra.mxu0 0.0
    %514 = vmatprep.subr.mxu0 0.0
    %515 = vmatpush2.msra.mxu0 0.0
    %516 = vmatprep.subr.mxu0 0.0
    %517 = vmatpush2.msra.mxu0 0.0
    %518 = vmatprep.subr.mxu0 0.0
    %519 = vmatpush2.msra.mxu0 0.0
    %520 = vmatprep.subr.mxu0 0.0
    %521 = vmatpush2.msra.mxu0 0.0
    %522 = vmatprep.subr.mxu0 0.0
    %523 = vmatpush2.msra.mxu0 0.0
    %524 = vmatprep.subr.mxu0 0.0
    %525 = vmatpush2.msra.mxu0 0.0
    %526 = vmatprep.subr.mxu0 0.0
    %527 = vmatpush2.msra.mxu0 0.0
    %528 = vmatprep.subr.mxu0 0.0
    %529 = vmatpush2.msra.mxu0 0.0
    %530 = vmatprep.subr.mxu0 0.0
    %531 = vmatpush2.msra.mxu0 0.0
    %532 = vmatprep.subr.mxu0 0.0
    %533 = vmatpush2.msra.mxu0 0.0
    %534 = vmatprep.subr.mxu0 0.0
    %535 = vmatpush2.msra.mxu0 0.0
    %536 = vmatprep.subr.mxu0 0.0
    %537 = vmatpush2.msra.mxu0 0.0
    %538 = vmatprep.subr.mxu0 0.0
    %539 = vmatpush2.msra.mxu0 0.0
    %540 = vmatprep.mubr.f32.mxu0 0.0
    %541 = vmatmul.mubr.f32.gmra.mxu0 %v469
    %v542 = vpop.f32.mrf.mxu0
    %v543 = vadd.f32 0.0, %v542
    %v544 = vpop.f32.mrf.mxu0
    %v545 = vadd.f32 0.0, %v544
    %546 = vdwg.mxu0
    %547 = vmatprep.subr.mxu0 %v108
    %548 = vmatpush1.msra.mxu0 %v107
    %549 = vmatprep.subr.mxu0 %v104
    %550 = vmatpush1.msra.mxu0 %v103
    %551 = vmatprep.subr.mxu0 %v100
    %552 = vmatpush1.msra.mxu0 %v99
    %553 = vmatprep.subr.mxu0 %v96
    %554 = vmatpush1.msra.mxu0 %v95
    %555 = vmatprep.subr.mxu0 %v92
    %556 = vmatpush1.msra.mxu0 %v91
    %557 = vmatprep.subr.mxu0 %v88
    %558 = vmatpush1.msra.mxu0 %v87
    %559 = vmatprep.subr.mxu0 %v84
    %560 = vmatpush1.msra.mxu0 %v83
    %561 = vmatprep.subr.mxu0 %v80
    %562 = vmatpush1.msra.mxu0 %v79
    %563 = vmatprep.subr.mxu0 %v76
    %564 = vmatpush1.msra.mxu0 %v75
    %565 = vmatprep.subr.mxu0 %v72
    %566 = vmatpush1.msra.mxu0 %v71
    %567 = vmatprep.subr.mxu0 %v68
    %568 = vmatpush1.msra.mxu0 %v67
    %569 = vmatprep.subr.mxu0 %v64
    %570 = vmatpush1.msra.mxu0 %v63
    %571 = vmatprep.subr.mxu0 %v60
    %572 = vmatpush1.msra.mxu0 %v59
    %573 = vmatprep.subr.mxu0 %v56
    %574 = vmatpush1.msra.mxu0 %v55
    %575 = vmatprep.subr.mxu0 %v52
    %576 = vmatpush1.msra.mxu0 %v51
    %577 = vmatprep.subr.mxu0 %v48
    %578 = vmatpush1.msra.mxu0 %v47
    %579 = vmatprep.subr.mxu0 0.0
    %580 = vmatpush2.msra.mxu0 0.0
    %581 = vmatprep.subr.mxu0 0.0
    %582 = vmatpush2.msra.mxu0 0.0
    %583 = vmatprep.subr.mxu0 0.0
    %584 = vmatpush2.msra.mxu0 0.0
    %585 = vmatprep.subr.mxu0 0.0
    %586 = vmatpush2.msra.mxu0 0.0
    %587 = vmatprep.subr.mxu0 0.0
    %588 = vmatpush2.msra.mxu0 0.0
    %589 = vmatprep.subr.mxu0 0.0
    %590 = vmatpush2.msra.mxu0 0.0
    %591 = vmatprep.subr.mxu0 0.0
    %592 = vmatpush2.msra.mxu0 0.0
    %593 = vmatprep.subr.mxu0 0.0
    %594 = vmatpush2.msra.mxu0 0.0
    %595 = vmatprep.subr.mxu0 0.0
    %596 = vmatpush2.msra.mxu0 0.0
    %597 = vmatprep.subr.mxu0 0.0
    %598 = vmatpush2.msra.mxu0 0.0
    %599 = vmatprep.subr.mxu0 0.0
    %600 = vmatpush2.msra.mxu0 0.0
    %601 = vmatprep.subr.mxu0 0.0
    %602 = vmatpush2.msra.mxu0 0.0
    %603 = vmatprep.subr.mxu0 0.0
    %604 = vmatpush2.msra.mxu0 0.0
    %605 = vmatprep.subr.mxu0 0.0
    %606 = vmatpush2.msra.mxu0 0.0
    %607 = vmatprep.subr.mxu0 0.0
    %608 = vmatpush2.msra.mxu0 0.0
    %609 = vmatprep.subr.mxu0 0.0
    %610 = vmatpush2.msra.mxu0 0.0
    %611 = vmatprep.mubr.f32.mxu0 0.0
    %612 = vmatmul.mubr.f32.gmra.mxu0 %v469
    %v613 = vpop.f32.mrf.mxu0
    %v614 = vadd.f32 0.0, %v613
    %v615 = vpop.f32.mrf.mxu0
    %v616 = vadd.f32 0.0, %v615
    %617 = vdwg.mxu0
    %v618 = vadd.f32 %v472, %v543
    %v619 = vadd.f32 %v473, %v545
    %v620 = vadd.f32 %v474, %v614
    %v621 = vadd.f32 %v475, %v616
    %v622 = vxor.u32 %v618, 2147483648
    %v623 = vmul.f32 %v622, 1.442695
    %v624 = vpow.pop %v623
    %v625 = vadd.f32 %v624, 1.0
    %v626 = vrcp.pop %v625
    %v627 = vmul.f32 1.0, %v626
    %v628 = vxor.u32 %v619, 2147483648
    %v629 = vmul.f32 %v628, 1.442695
    %v630 = vpow.pop %v629
    %v631 = vadd.f32 %v630, 1.0
    %v632 = vrcp.pop %v631
    %v633 = vmul.f32 1.0, %v632
    %v634 = vtanh.pop %v620
    %v635 = vxor.u32 %v621, 2147483648
    %v636 = vmul.f32 %v635, 1.442695
    %v637 = vpow.pop %v636
    %v638 = vadd.f32 %v637, 1.0
    %v639 = vrcp.pop %v638
    %v640 = vmul.f32 1.0, %v639
    %v641 = vmul.f32 %v633, %v470
    %v642 = vmul.f32 %v627, %v634
    %v643 = vadd.f32 %v641, %v642
    %v644 = vtanh.pop %v643
    %v645 = vmul.f32 %v640, %v644
    %646 = vst [vmem:[#allocation4] sm:$0xff] %v643
    %647 = vst [vmem:[#allocation3] sm:$0xff] %v645
    %s648 = scalar_lea.vmem [#allocation9], 16
    %649 = vst [vmem:[%s648] sm:$0xff] %v645
    %v650 = vld [vmem:[#allocation3] sm:$0xff]
    %v651 = vld [vmem:[#allocation4] sm:$0xff]
    %s652 = scalar_lea.vmem [#allocation6], 96
    %v653 = vld [vmem:[%s652] sm:$0xff]
    %v654 = vld [vmem:[%s652 + $0x8] sm:$0xff]
    %v655 = vld [vmem:[%s652 + $0x10] sm:$0xff]
    %v656 = vld [vmem:[%s652 + $0x18] sm:$0xff]
    %657 = vmatprep.subr.mxu0 %v106
    %658 = vmatpush1.msra.mxu0 %v105
    %659 = vmatprep.subr.mxu0 %v102
    %660 = vmatpush1.msra.mxu0 %v101
    %661 = vmatprep.subr.mxu0 %v98
    %662 = vmatpush1.msra.mxu0 %v97
    %663 = vmatprep.subr.mxu0 %v94
    %664 = vmatpush1.msra.mxu0 %v93
    %665 = vmatprep.subr.mxu0 %v90
    %666 = vmatpush1.msra.mxu0 %v89
    %667 = vmatprep.subr.mxu0 %v86
    %668 = vmatpush1.msra.mxu0 %v85
    %669 = vmatprep.subr.mxu0 %v82
    %670 = vmatpush1.msra.mxu0 %v81
    %671 = vmatprep.subr.mxu0 %v78
    %672 = vmatpush1.msra.mxu0 %v77
    %673 = vmatprep.subr.mxu0 %v74
    %674 = vmatpush1.msra.mxu0 %v73
    %675 = vmatprep.subr.mxu0 %v70
    %676 = vmatpush1.msra.mxu0 %v69
    %677 = vmatprep.subr.mxu0 %v66
    %678 = vmatpush1.msra.mxu0 %v65
    %679 = vmatprep.subr.mxu0 %v62
    %680 = vmatpush1.msra.mxu0 %v61
    %681 = vmatprep.subr.mxu0 %v58
    %682 = vmatpush1.msra.mxu0 %v57
    %683 = vmatprep.subr.mxu0 %v54
    %684 = vmatpush1.msra.mxu0 %v53
    %685 = vmatprep.subr.mxu0 %v50
    %686 = vmatpush1.msra.mxu0 %v49
    %687 = vmatprep.subr.mxu0 %v46
    %688 = vmatpush1.msra.mxu0 %v45
    %689 = vmatprep.subr.mxu0 0.0
    %690 = vmatpush2.msra.mxu0 0.0
    %691 = vmatprep.subr.mxu0 0.0
    %692 = vmatpush2.msra.mxu0 0.0
    %693 = vmatprep.subr.mxu0 0.0
    %694 = vmatpush2.msra.mxu0 0.0
    %695 = vmatprep.subr.mxu0 0.0
    %696 = vmatpush2.msra.mxu0 0.0
    %697 = vmatprep.subr.mxu0 0.0
    %698 = vmatpush2.msra.mxu0 0.0
    %699 = vmatprep.subr.mxu0 0.0
    %700 = vmatpush2.msra.mxu0 0.0
    %701 = vmatprep.subr.mxu0 0.0
    %702 = vmatpush2.msra.mxu0 0.0
    %703 = vmatprep.subr.mxu0 0.0
    %704 = vmatpush2.msra.mxu0 0.0
    %705 = vmatprep.subr.mxu0 0.0
    %706 = vmatpush2.msra.mxu0 0.0
    %707 = vmatprep.subr.mxu0 0.0
    %708 = vmatpush2.msra.mxu0 0.0
    %709 = vmatprep.subr.mxu0 0.0
    %710 = vmatpush2.msra.mxu0 0.0
    %711 = vmatprep.subr.mxu0 0.0
    %712 = vmatpush2.msra.mxu0 0.0
    %713 = vmatprep.subr.mxu0 0.0
    %714 = vmatpush2.msra.mxu0 0.0
    %715 = vmatprep.subr.mxu0 0.0
    %716 = vmatpush2.msra.mxu0 0.0
    %717 = vmatprep.subr.mxu0 0.0
    %718 = vmatpush2.msra.mxu0 0.0
    %719 = vmatprep.subr.mxu0 0.0
    %720 = vmatpush2.msra.mxu0 0.0
    %721 = vmatprep.mubr.f32.mxu0 0.0
    %722 = vmatmul.mubr.f32.gmra.mxu0 %v650
    %v723 = vpop.f32.mrf.mxu0
    %v724 = vadd.f32 0.0, %v723
    %v725 = vpop.f32.mrf.mxu0
    %v726 = vadd.f32 0.0, %v725
    %727 = vdwg.mxu0
    %728 = vmatprep.subr.mxu0 %v108
    %729 = vmatpush1.msra.mxu0 %v107
    %730 = vmatprep.subr.mxu0 %v104
    %731 = vmatpush1.msra.mxu0 %v103
    %732 = vmatprep.subr.mxu0 %v100
    %733 = vmatpush1.msra.mxu0 %v99
    %734 = vmatprep.subr.mxu0 %v96
    %735 = vmatpush1.msra.mxu0 %v95
    %736 = vmatprep.subr.mxu0 %v92
    %737 = vmatpush1.msra.mxu0 %v91
    %738 = vmatprep.subr.mxu0 %v88
    %739 = vmatpush1.msra.mxu0 %v87
    %740 = vmatprep.subr.mxu0 %v84
    %741 = vmatpush1.msra.mxu0 %v83
    %742 = vmatprep.subr.mxu0 %v80
    %743 = vmatpush1.msra.mxu0 %v79
    %744 = vmatprep.subr.mxu0 %v76
    %745 = vmatpush1.msra.mxu0 %v75
    %746 = vmatprep.subr.mxu0 %v72
    %747 = vmatpush1.msra.mxu0 %v71
    %748 = vmatprep.subr.mxu0 %v68
    %749 = vmatpush1.msra.mxu0 %v67
    %750 = vmatprep.subr.mxu0 %v64
    %751 = vmatpush1.msra.mxu0 %v63
    %752 = vmatprep.subr.mxu0 %v60
    %753 = vmatpush1.msra.mxu0 %v59
    %754 = vmatprep.subr.mxu0 %v56
    %755 = vmatpush1.msra.mxu0 %v55
    %756 = vmatprep.subr.mxu0 %v52
    %757 = vmatpush1.msra.mxu0 %v51
    %758 = vmatprep.subr.mxu0 %v48
    %759 = vmatpush1.msra.mxu0 %v47
    %760 = vmatprep.subr.mxu0 0.0
    %761 = vmatpush2.msra.mxu0 0.0
    %762 = vmatprep.subr.mxu0 0.0
    %763 = vmatpush2.msra.mxu0 0.0
    %764 = vmatprep.subr.mxu0 0.0
    %765 = vmatpush2.msra.mxu0 0.0
    %766 = vmatprep.subr.mxu0 0.0
    %767 = vmatpush2.msra.mxu0 0.0
    %768 = vmatprep.subr.mxu0 0.0
    %769 = vmatpush2.msra.mxu0 0.0
    %770 = vmatprep.subr.mxu0 0.0
    %771 = vmatpush2.msra.mxu0 0.0
    %772 = vmatprep.subr.mxu0 0.0
    %773 = vmatpush2.msra.mxu0 0.0
    %774 = vmatprep.subr.mxu0 0.0
    %775 = vmatpush2.msra.mxu0 0.0
    %776 = vmatprep.subr.mxu0 0.0
    %777 = vmatpush2.msra.mxu0 0.0
    %778 = vmatprep.subr.mxu0 0.0
    %779 = vmatpush2.msra.mxu0 0.0
    %780 = vmatprep.subr.mxu0 0.0
    %781 = vmatpush2.msra.mxu0 0.0
    %782 = vmatprep.subr.mxu0 0.0
    %783 = vmatpush2.msra.mxu0 0.0
    %784 = vmatprep.subr.mxu0 0.0
    %785 = vmatpush2.msra.mxu0 0.0
    %786 = vmatprep.subr.mxu0 0.0
    %787 = vmatpush2.msra.mxu0 0.0
    %788 = vmatprep.subr.mxu0 0.0
    %789 = vmatpush2.msra.mxu0 0.0
    %790 = vmatprep.subr.mxu0 0.0
    %791 = vmatpush2.msra.mxu0 0.0
    %792 = vmatprep.mubr.f32.mxu0 0.0
    %793 = vmatmul.mubr.f32.gmra.mxu0 %v650
    %v794 = vpop.f32.mrf.mxu0
    %v795 = vadd.f32 0.0, %v794
    %v796 = vpop.f32.mrf.mxu0
    %v797 = vadd.f32 0.0, %v796
    %798 = vdwg.mxu0
    %v799 = vadd.f32 %v653, %v724
    %v800 = vadd.f32 %v654, %v726
    %v801 = vadd.f32 %v655, %v795
    %v802 = vadd.f32 %v656, %v797
    %v803 = vxor.u32 %v799, 2147483648
    %v804 = vmul.f32 %v803, 1.442695
    %v805 = vpow.pop %v804
    %v806 = vadd.f32 %v805, 1.0
    %v807 = vrcp.pop %v806
    %v808 = vmul.f32 1.0, %v807
    %v809 = vxor.u32 %v800, 2147483648
    %v810 = vmul.f32 %v809, 1.442695
    %v811 = vpow.pop %v810
    %v812 = vadd.f32 %v811, 1.0
    %v813 = vrcp.pop %v812
    %v814 = vmul.f32 1.0, %v813
    %v815 = vtanh.pop %v801
    %v816 = vxor.u32 %v802, 2147483648
    %v817 = vmul.f32 %v816, 1.442695
    %v818 = vpow.pop %v817
    %v819 = vadd.f32 %v818, 1.0
    %v820 = vrcp.pop %v819
    %v821 = vmul.f32 1.0, %v820
    %v822 = vmul.f32 %v814, %v651
    %v823 = vmul.f32 %v808, %v815
    %v824 = vadd.f32 %v822, %v823
    %v825 = vtanh.pop %v824
    %v826 = vmul.f32 %v821, %v825
    %827 = vst [vmem:[#allocation4] sm:$0xff] %v824
    %828 = vst [vmem:[#allocation3] sm:$0xff] %v826
    %s829 = scalar_lea.vmem [#allocation9], 24
    %830 = vst [vmem:[%s829] sm:$0xff] %v826
    %v831 = vld [vmem:[#allocation3] sm:$0xff]
    %v832 = vld [vmem:[#allocation4] sm:$0xff]
    %s833 = scalar_lea.vmem [#allocation6], 128
    %v834 = vld [vmem:[%s833] sm:$0xff]
    %v835 = vld [vmem:[%s833 + $0x8] sm:$0xff]
    %v836 = vld [vmem:[%s833 + $0x10] sm:$0xff]
    %v837 = vld [vmem:[%s833 + $0x18] sm:$0xff]
    %838 = vmatprep.subr.mxu0 %v106
    %839 = vmatpush1.msra.mxu0 %v105
    %840 = vmatprep.subr.mxu0 %v102
    %841 = vmatpush1.msra.mxu0 %v101
    %842 = vmatprep.subr.mxu0 %v98
    %843 = vmatpush1.msra.mxu0 %v97
    %844 = vmatprep.subr.mxu0 %v94
    %845 = vmatpush1.msra.mxu0 %v93
    %846 = vmatprep.subr.mxu0 %v90
    %847 = vmatpush1.msra.mxu0 %v89
    %848 = vmatprep.subr.mxu0 %v86
    %849 = vmatpush1.msra.mxu0 %v85
    %850 = vmatprep.subr.mxu0 %v82
    %851 = vmatpush1.msra.mxu0 %v81
    %852 = vmatprep.subr.mxu0 %v78
    %853 = vmatpush1.msra.mxu0 %v77
    %854 = vmatprep.subr.mxu0 %v74
    %855 = vmatpush1.msra.mxu0 %v73
    %856 = vmatprep.subr.mxu0 %v70
    %857 = vmatpush1.msra.mxu0 %v69
    %858 = vmatprep.subr.mxu0 %v66
    %859 = vmatpush1.msra.mxu0 %v65
    %860 = vmatprep.subr.mxu0 %v62
    %861 = vmatpush1.msra.mxu0 %v61
    %862 = vmatprep.subr.mxu0 %v58
    %863 = vmatpush1.msra.mxu0 %v57
    %864 = vmatprep.subr.mxu0 %v54
    %865 = vmatpush1.msra.mxu0 %v53
    %866 = vmatprep.subr.mxu0 %v50
    %867 = vmatpush1.msra.mxu0 %v49
    %868 = vmatprep.subr.mxu0 %v46
    %869 = vmatpush1.msra.mxu0 %v45
    %870 = vmatprep.subr.mxu0 0.0
    %871 = vmatpush2.msra.mxu0 0.0
    %872 = vmatprep.subr.mxu0 0.0
    %873 = vmatpush2.msra.mxu0 0.0
    %874 = vmatprep.subr.mxu0 0.0
    %875 = vmatpush2.msra.mxu0 0.0
    %876 = vmatprep.subr.mxu0 0.0
    %877 = vmatpush2.msra.mxu0 0.0
    %878 = vmatprep.subr.mxu0 0.0
    %879 = vmatpush2.msra.mxu0 0.0
    %880 = vmatprep.subr.mxu0 0.0
    %881 = vmatpush2.msra.mxu0 0.0
    %882 = vmatprep.subr.mxu0 0.0
    %883 = vmatpush2.msra.mxu0 0.0
    %884 = vmatprep.subr.mxu0 0.0
    %885 = vmatpush2.msra.mxu0 0.0
    %886 = vmatprep.subr.mxu0 0.0
    %887 = vmatpush2.msra.mxu0 0.0
    %888 = vmatprep.subr.mxu0 0.0
    %889 = vmatpush2.msra.mxu0 0.0
    %890 = vmatprep.subr.mxu0 0.0
    %891 = vmatpush2.msra.mxu0 0.0
    %892 = vmatprep.subr.mxu0 0.0
    %893 = vmatpush2.msra.mxu0 0.0
    %894 = vmatprep.subr.mxu0 0.0
    %895 = vmatpush2.msra.mxu0 0.0
    %896 = vmatprep.subr.mxu0 0.0
    %897 = vmatpush2.msra.mxu0 0.0
    %898 = vmatprep.subr.mxu0 0.0
    %899 = vmatpush2.msra.mxu0 0.0
    %900 = vmatprep.subr.mxu0 0.0
    %901 = vmatpush2.msra.mxu0 0.0
    %902 = vmatprep.mubr.f32.mxu0 0.0
    %903 = vmatmul.mubr.f32.gmra.mxu0 %v831
    %v904 = vpop.f32.mrf.mxu0
    %v905 = vadd.f32 0.0, %v904
    %v906 = vpop.f32.mrf.mxu0
    %v907 = vadd.f32 0.0, %v906
    %908 = vdwg.mxu0
    %909 = vmatprep.subr.mxu0 %v108
    %910 = vmatpush1.msra.mxu0 %v107
    %911 = vmatprep.subr.mxu0 %v104
    %912 = vmatpush1.msra.mxu0 %v103
    %913 = vmatprep.subr.mxu0 %v100
    %914 = vmatpush1.msra.mxu0 %v99
    %915 = vmatprep.subr.mxu0 %v96
    %916 = vmatpush1.msra.mxu0 %v95
    %917 = vmatprep.subr.mxu0 %v92
    %918 = vmatpush1.msra.mxu0 %v91
    %919 = vmatprep.subr.mxu0 %v88
    %920 = vmatpush1.msra.mxu0 %v87
    %921 = vmatprep.subr.mxu0 %v84
    %922 = vmatpush1.msra.mxu0 %v83
    %923 = vmatprep.subr.mxu0 %v80
    %924 = vmatpush1.msra.mxu0 %v79
    %925 = vmatprep.subr.mxu0 %v76
    %926 = vmatpush1.msra.mxu0 %v75
    %927 = vmatprep.subr.mxu0 %v72
    %928 = vmatpush1.msra.mxu0 %v71
    %929 = vmatprep.subr.mxu0 %v68
    %930 = vmatpush1.msra.mxu0 %v67
    %931 = vmatprep.subr.mxu0 %v64
    %932 = vmatpush1.msra.mxu0 %v63
    %933 = vmatprep.subr.mxu0 %v60
    %934 = vmatpush1.msra.mxu0 %v59
    %935 = vmatprep.subr.mxu0 %v56
    %936 = vmatpush1.msra.mxu0 %v55
    %937 = vmatprep.subr.mxu0 %v52
    %938 = vmatpush1.msra.mxu0 %v51
    %939 = vmatprep.subr.mxu0 %v48
    %940 = vmatpush1.msra.mxu0 %v47
    %941 = vmatprep.subr.mxu0 0.0
    %942 = vmatpush2.msra.mxu0 0.0
    %943 = vmatprep.subr.mxu0 0.0
    %944 = vmatpush2.msra.mxu0 0.0
    %945 = vmatprep.subr.mxu0 0.0
    %946 = vmatpush2.msra.mxu0 0.0
    %947 = vmatprep.subr.mxu0 0.0
    %948 = vmatpush2.msra.mxu0 0.0
    %949 = vmatprep.subr.mxu0 0.0
    %950 = vmatpush2.msra.mxu0 0.0
    %951 = vmatprep.subr.mxu0 0.0
    %952 = vmatpush2.msra.mxu0 0.0
    %953 = vmatprep.subr.mxu0 0.0
    %954 = vmatpush2.msra.mxu0 0.0
    %955 = vmatprep.subr.mxu0 0.0
    %956 = vmatpush2.msra.mxu0 0.0
    %957 = vmatprep.subr.mxu0 0.0
    %958 = vmatpush2.msra.mxu0 0.0
    %959 = vmatprep.subr.mxu0 0.0
    %960 = vmatpush2.msra.mxu0 0.0
    %961 = vmatprep.subr.mxu0 0.0
    %962 = vmatpush2.msra.mxu0 0.0
    %963 = vmatprep.subr.mxu0 0.0
    %964 = vmatpush2.msra.mxu0 0.0
    %965 = vmatprep.subr.mxu0 0.0
    %966 = vmatpush2.msra.mxu0 0.0
    %967 = vmatprep.subr.mxu0 0.0
    %968 = vmatpush2.msra.mxu0 0.0
    %969 = vmatprep.subr.mxu0 0.0
    %970 = vmatpush2.msra.mxu0 0.0
    %971 = vmatprep.subr.mxu0 0.0
    %972 = vmatpush2.msra.mxu0 0.0
    %973 = vmatprep.mubr.f32.mxu0 0.0
    %974 = vmatmul.mubr.f32.gmra.mxu0 %v831
    %v975 = vpop.f32.mrf.mxu0
    %v976 = vadd.f32 0.0, %v975
    %v977 = vpop.f32.mrf.mxu0
    %v978 = vadd.f32 0.0, %v977
    %979 = vdwg.mxu0
    %v980 = vadd.f32 %v834, %v905
    %v981 = vadd.f32 %v835, %v907
    %v982 = vadd.f32 %v836, %v976
    %v983 = vadd.f32 %v837, %v978
    %v984 = vxor.u32 %v980, 2147483648
    %v985 = vmul.f32 %v984, 1.442695
    %v986 = vpow.pop %v985
    %v987 = vadd.f32 %v986, 1.0
    %v988 = vrcp.pop %v987
    %v989 = vmul.f32 1.0, %v988
    %v990 = vxor.u32 %v981, 2147483648
    %v991 = vmul.f32 %v990, 1.442695
    %v992 = vpow.pop %v991
    %v993 = vadd.f32 %v992, 1.0
    %v994 = vrcp.pop %v993
    %v995 = vmul.f32 1.0, %v994
    %v996 = vtanh.pop %v982
    %v997 = vxor.u32 %v983, 2147483648
    %v998 = vmul.f32 %v997, 1.442695
    %v999 = vpow.pop %v998
    %v1000 = vadd.f32 %v999, 1.0
    %v1001 = vrcp.pop %v1000
    %v1002 = vmul.f32 1.0, %v1001
    %v1003 = vmul.f32 %v995, %v832
    %v1004 = vmul.f32 %v989, %v996
    %v1005 = vadd.f32 %v1003, %v1004
    %v1006 = vtanh.pop %v1005
    %v1007 = vmul.f32 %v1002, %v1006
    %1008 = vst [vmem:[#allocation4] sm:$0xff] %v1005
    %1009 = vst [vmem:[#allocation3] sm:$0xff] %v1007
    %s1010 = scalar_lea.vmem [#allocation9], 32
    %1011 = vst [vmem:[%s1010] sm:$0xff] %v1007
    %v1012 = vld [vmem:[#allocation3] sm:$0xff]
    %v1013 = vld [vmem:[#allocation4] sm:$0xff]
    %s1014 = scalar_lea.vmem [#allocation6], 160
    %v1015 = vld [vmem:[%s1014] sm:$0xff]
    %v1016 = vld [vmem:[%s1014 + $0x8] sm:$0xff]
    %v1017 = vld [vmem:[%s1014 + $0x10] sm:$0xff]
    %v1018 = vld [vmem:[%s1014 + $0x18] sm:$0xff]
    %1019 = vmatprep.subr.mxu0 %v106
    %1020 = vmatpush1.msra.mxu0 %v105
    %1021 = vmatprep.subr.mxu0 %v102
    %1022 = vmatpush1.msra.mxu0 %v101
    %1023 = vmatprep.subr.mxu0 %v98
    %1024 = vmatpush1.msra.mxu0 %v97
    %1025 = vmatprep.subr.mxu0 %v94
    %1026 = vmatpush1.msra.mxu0 %v93
    %1027 = vmatprep.subr.mxu0 %v90
    %1028 = vmatpush1.msra.mxu0 %v89
    %1029 = vmatprep.subr.mxu0 %v86
    %1030 = vmatpush1.msra.mxu0 %v85
    %1031 = vmatprep.subr.mxu0 %v82
    %1032 = vmatpush1.msra.mxu0 %v81
    %1033 = vmatprep.subr.mxu0 %v78
    %1034 = vmatpush1.msra.mxu0 %v77
    %1035 = vmatprep.subr.mxu0 %v74
    %1036 = vmatpush1.msra.mxu0 %v73
    %1037 = vmatprep.subr.mxu0 %v70
    %1038 = vmatpush1.msra.mxu0 %v69
    %1039 = vmatprep.subr.mxu0 %v66
    %1040 = vmatpush1.msra.mxu0 %v65
    %1041 = vmatprep.subr.mxu0 %v62
    %1042 = vmatpush1.msra.mxu0 %v61
    %1043 = vmatprep.subr.mxu0 %v58
    %1044 = vmatpush1.msra.mxu0 %v57
    %1045 = vmatprep.subr.mxu0 %v54
    %1046 = vmatpush1.msra.mxu0 %v53
    %1047 = vmatprep.subr.mxu0 %v50
    %1048 = vmatpush1.msra.mxu0 %v49
    %1049 = vmatprep.subr.mxu0 %v46
    %1050 = vmatpush1.msra.mxu0 %v45
    %1051 = vmatprep.subr.mxu0 0.0
    %1052 = vmatpush2.msra.mxu0 0.0
    %1053 = vmatprep.subr.mxu0 0.0
    %1054 = vmatpush2.msra.mxu0 0.0
    %1055 = vmatprep.subr.mxu0 0.0
    %1056 = vmatpush2.msra.mxu0 0.0
    %1057 = vmatprep.subr.mxu0 0.0
    %1058 = vmatpush2.msra.mxu0 0.0
    %1059 = vmatprep.subr.mxu0 0.0
    %1060 = vmatpush2.msra.mxu0 0.0
    %1061 = vmatprep.subr.mxu0 0.0
    %1062 = vmatpush2.msra.mxu0 0.0
    %1063 = vmatprep.subr.mxu0 0.0
    %1064 = vmatpush2.msra.mxu0 0.0
    %1065 = vmatprep.subr.mxu0 0.0
    %1066 = vmatpush2.msra.mxu0 0.0
    %1067 = vmatprep.subr.mxu0 0.0
    %1068 = vmatpush2.msra.mxu0 0.0
    %1069 = vmatprep.subr.mxu0 0.0
    %1070 = vmatpush2.msra.mxu0 0.0
    %1071 = vmatprep.subr.mxu0 0.0
    %1072 = vmatpush2.msra.mxu0 0.0
    %1073 = vmatprep.subr.mxu0 0.0
    %1074 = vmatpush2.msra.mxu0 0.0
    %1075 = vmatprep.subr.mxu0 0.0
    %1076 = vmatpush2.msra.mxu0 0.0
    %1077 = vmatprep.subr.mxu0 0.0
    %1078 = vmatpush2.msra.mxu0 0.0
    %1079 = vmatprep.subr.mxu0 0.0
    %1080 = vmatpush2.msra.mxu0 0.0
    %1081 = vmatprep.subr.mxu0 0.0
    %1082 = vmatpush2.msra.mxu0 0.0
    %1083 = vmatprep.mubr.f32.mxu0 0.0
    %1084 = vmatmul.mubr.f32.gmra.mxu0 %v1012
    %v1085 = vpop.f32.mrf.mxu0
    %v1086 = vadd.f32 0.0, %v1085
    %v1087 = vpop.f32.mrf.mxu0
    %v1088 = vadd.f32 0.0, %v1087
    %1089 = vdwg.mxu0
    %1090 = vmatprep.subr.mxu0 %v108
    %1091 = vmatpush1.msra.mxu0 %v107
    %1092 = vmatprep.subr.mxu0 %v104
    %1093 = vmatpush1.msra.mxu0 %v103
    %1094 = vmatprep.subr.mxu0 %v100
    %1095 = vmatpush1.msra.mxu0 %v99
    %1096 = vmatprep.subr.mxu0 %v96
    %1097 = vmatpush1.msra.mxu0 %v95
    %1098 = vmatprep.subr.mxu0 %v92
    %1099 = vmatpush1.msra.mxu0 %v91
    %1100 = vmatprep.subr.mxu0 %v88
    %1101 = vmatpush1.msra.mxu0 %v87
    %1102 = vmatprep.subr.mxu0 %v84
    %1103 = vmatpush1.msra.mxu0 %v83
    %1104 = vmatprep.subr.mxu0 %v80
    %1105 = vmatpush1.msra.mxu0 %v79
    %1106 = vmatprep.subr.mxu0 %v76
    %1107 = vmatpush1.msra.mxu0 %v75
    %1108 = vmatprep.subr.mxu0 %v72
    %1109 = vmatpush1.msra.mxu0 %v71
    %1110 = vmatprep.subr.mxu0 %v68
    %1111 = vmatpush1.msra.mxu0 %v67
    %1112 = vmatprep.subr.mxu0 %v64
    %1113 = vmatpush1.msra.mxu0 %v63
    %1114 = vmatprep.subr.mxu0 %v60
    %1115 = vmatpush1.msra.mxu0 %v59
    %1116 = vmatprep.subr.mxu0 %v56
    %1117 = vmatpush1.msra.mxu0 %v55
    %1118 = vmatprep.subr.mxu0 %v52
    %1119 = vmatpush1.msra.mxu0 %v51
    %1120 = vmatprep.subr.mxu0 %v48
    %1121 = vmatpush1.msra.mxu0 %v47
    %1122 = vmatprep.subr.mxu0 0.0
    %1123 = vmatpush2.msra.mxu0 0.0
    %1124 = vmatprep.subr.mxu0 0.0
    %1125 = vmatpush2.msra.mxu0 0.0
    %1126 = vmatprep.subr.mxu0 0.0
    %1127 = vmatpush2.msra.mxu0 0.0
    %1128 = vmatprep.subr.mxu0 0.0
    %1129 = vmatpush2.msra.mxu0 0.0
    %1130 = vmatprep.subr.mxu0 0.0
    %1131 = vmatpush2.msra.mxu0 0.0
    %1132 = vmatprep.subr.mxu0 0.0
    %1133 = vmatpush2.msra.mxu0 0.0
    %1134 = vmatprep.subr.mxu0 0.0
    %1135 = vmatpush2.msra.mxu0 0.0
    %1136 = vmatprep.subr.mxu0 0.0
    %1137 = vmatpush2.msra.mxu0 0.0
    %1138 = vmatprep.subr.mxu0 0.0
    %1139 = vmatpush2.msra.mxu0 0.0
    %1140 = vmatprep.subr.mxu0 0.0
    %1141 = vmatpush2.msra.mxu0 0.0
    %1142 = vmatprep.subr.mxu0 0.0
    %1143 = vmatpush2.msra.mxu0 0.0
    %1144 = vmatprep.subr.mxu0 0.0
    %1145 = vmatpush2.msra.mxu0 0.0
    %1146 = vmatprep.subr.mxu0 0.0
    %1147 = vmatpush2.msra.mxu0 0.0
    %1148 = vmatprep.subr.mxu0 0.0
    %1149 = vmatpush2.msra.mxu0 0.0
    %1150 = vmatprep.subr.mxu0 0.0
    %1151 = vmatpush2.msra.mxu0 0.0
    %1152 = vmatprep.subr.mxu0 0.0
    %1153 = vmatpush2.msra.mxu0 0.0
    %1154 = vmatprep.mubr.f32.mxu0 0.0
    %1155 = vmatmul.mubr.f32.gmra.mxu0 %v1012
    %v1156 = vpop.f32.mrf.mxu0
    %v1157 = vadd.f32 0.0, %v1156
    %v1158 = vpop.f32.mrf.mxu0
    %v1159 = vadd.f32 0.0, %v1158
    %1160 = vdwg.mxu0
    %v1161 = vadd.f32 %v1015, %v1086
    %v1162 = vadd.f32 %v1016, %v1088
    %v1163 = vadd.f32 %v1017, %v1157
    %v1164 = vadd.f32 %v1018, %v1159
    %v1165 = vxor.u32 %v1161, 2147483648
    %v1166 = vmul.f32 %v1165, 1.442695
    %v1167 = vpow.pop %v1166
    %v1168 = vadd.f32 %v1167, 1.0
    %v1169 = vrcp.pop %v1168
    %v1170 = vmul.f32 1.0, %v1169
    %v1171 = vxor.u32 %v1162, 2147483648
    %v1172 = vmul.f32 %v1171, 1.442695
    %v1173 = vpow.pop %v1172
    %v1174 = vadd.f32 %v1173, 1.0
    %v1175 = vrcp.pop %v1174
    %v1176 = vmul.f32 1.0, %v1175
    %v1177 = vtanh.pop %v1163
    %v1178 = vxor.u32 %v1164, 2147483648
    %v1179 = vmul.f32 %v1178, 1.442695
    %v1180 = vpow.pop %v1179
    %v1181 = vadd.f32 %v1180, 1.0
    %v1182 = vrcp.pop %v1181
    %v1183 = vmul.f32 1.0, %v1182
    %v1184 = vmul.f32 %v1176, %v1013
    %v1185 = vmul.f32 %v1170, %v1177
    %v1186 = vadd.f32 %v1184, %v1185
    %v1187 = vtanh.pop %v1186
    %v1188 = vmul.f32 %v1183, %v1187
    %1189 = vst [vmem:[#allocation4] sm:$0xff] %v1186
    %1190 = vst [vmem:[#allocation3] sm:$0xff] %v1188
    %s1191 = scalar_lea.vmem [#allocation9], 40
    %1192 = vst [vmem:[%s1191] sm:$0xff] %v1188
    %v1193 = vld [vmem:[#allocation3] sm:$0xff]
    %v1194 = vld [vmem:[#allocation4] sm:$0xff]
    %s1195 = scalar_lea.vmem [#allocation6], 192
    %v1196 = vld [vmem:[%s1195] sm:$0xff]
    %v1197 = vld [vmem:[%s1195 + $0x8] sm:$0xff]
    %v1198 = vld [vmem:[%s1195 + $0x10] sm:$0xff]
    %v1199 = vld [vmem:[%s1195 + $0x18] sm:$0xff]
    %1200 = vmatprep.subr.mxu0 %v106
    %1201 = vmatpush1.msra.mxu0 %v105
    %1202 = vmatprep.subr.mxu0 %v102
    %1203 = vmatpush1.msra.mxu0 %v101
    %1204 = vmatprep.subr.mxu0 %v98
    %1205 = vmatpush1.msra.mxu0 %v97
    %1206 = vmatprep.subr.mxu0 %v94
    %1207 = vmatpush1.msra.mxu0 %v93
    %1208 = vmatprep.subr.mxu0 %v90
    %1209 = vmatpush1.msra.mxu0 %v89
    %1210 = vmatprep.subr.mxu0 %v86
    %1211 = vmatpush1.msra.mxu0 %v85
    %1212 = vmatprep.subr.mxu0 %v82
    %1213 = vmatpush1.msra.mxu0 %v81
    %1214 = vmatprep.subr.mxu0 %v78
    %1215 = vmatpush1.msra.mxu0 %v77
    %1216 = vmatprep.subr.mxu0 %v74
    %1217 = vmatpush1.msra.mxu0 %v73
    %1218 = vmatprep.subr.mxu0 %v70
    %1219 = vmatpush1.msra.mxu0 %v69
    %1220 = vmatprep.subr.mxu0 %v66
    %1221 = vmatpush1.msra.mxu0 %v65
    %1222 = vmatprep.subr.mxu0 %v62
    %1223 = vmatpush1.msra.mxu0 %v61
    %1224 = vmatprep.subr.mxu0 %v58
    %1225 = vmatpush1.msra.mxu0 %v57
    %1226 = vmatprep.subr.mxu0 %v54
    %1227 = vmatpush1.msra.mxu0 %v53
    %1228 = vmatprep.subr.mxu0 %v50
    %1229 = vmatpush1.msra.mxu0 %v49
    %1230 = vmatprep.subr.mxu0 %v46
    %1231 = vmatpush1.msra.mxu0 %v45
    %1232 = vmatprep.subr.mxu0 0.0
    %1233 = vmatpush2.msra.mxu0 0.0
    %1234 = vmatprep.subr.mxu0 0.0
    %1235 = vmatpush2.msra.mxu0 0.0
    %1236 = vmatprep.subr.mxu0 0.0
    %1237 = vmatpush2.msra.mxu0 0.0
    %1238 = vmatprep.subr.mxu0 0.0
    %1239 = vmatpush2.msra.mxu0 0.0
    %1240 = vmatprep.subr.mxu0 0.0
    %1241 = vmatpush2.msra.mxu0 0.0
    %1242 = vmatprep.subr.mxu0 0.0
    %1243 = vmatpush2.msra.mxu0 0.0
    %1244 = vmatprep.subr.mxu0 0.0
    %1245 = vmatpush2.msra.mxu0 0.0
    %1246 = vmatprep.subr.mxu0 0.0
    %1247 = vmatpush2.msra.mxu0 0.0
    %1248 = vmatprep.subr.mxu0 0.0
    %1249 = vmatpush2.msra.mxu0 0.0
    %1250 = vmatprep.subr.mxu0 0.0
    %1251 = vmatpush2.msra.mxu0 0.0
    %1252 = vmatprep.subr.mxu0 0.0
    %1253 = vmatpush2.msra.mxu0 0.0
    %1254 = vmatprep.subr.mxu0 0.0
    %1255 = vmatpush2.msra.mxu0 0.0
    %1256 = vmatprep.subr.mxu0 0.0
    %1257 = vmatpush2.msra.mxu0 0.0
    %1258 = vmatprep.subr.mxu0 0.0
    %1259 = vmatpush2.msra.mxu0 0.0
    %1260 = vmatprep.subr.mxu0 0.0
    %1261 = vmatpush2.msra.mxu0 0.0
    %1262 = vmatprep.subr.mxu0 0.0
    %1263 = vmatpush2.msra.mxu0 0.0
    %1264 = vmatprep.mubr.f32.mxu0 0.0
    %1265 = vmatmul.mubr.f32.gmra.mxu0 %v1193
    %v1266 = vpop.f32.mrf.mxu0
    %v1267 = vadd.f32 0.0, %v1266
    %v1268 = vpop.f32.mrf.mxu0
    %v1269 = vadd.f32 0.0, %v1268
    %1270 = vdwg.mxu0
    %1271 = vmatprep.subr.mxu0 %v108
    %1272 = vmatpush1.msra.mxu0 %v107
    %1273 = vmatprep.subr.mxu0 %v104
    %1274 = vmatpush1.msra.mxu0 %v103
    %1275 = vmatprep.subr.mxu0 %v100
    %1276 = vmatpush1.msra.mxu0 %v99
    %1277 = vmatprep.subr.mxu0 %v96
    %1278 = vmatpush1.msra.mxu0 %v95
    %1279 = vmatprep.subr.mxu0 %v92
    %1280 = vmatpush1.msra.mxu0 %v91
    %1281 = vmatprep.subr.mxu0 %v88
    %1282 = vmatpush1.msra.mxu0 %v87
    %1283 = vmatprep.subr.mxu0 %v84
    %1284 = vmatpush1.msra.mxu0 %v83
    %1285 = vmatprep.subr.mxu0 %v80
    %1286 = vmatpush1.msra.mxu0 %v79
    %1287 = vmatprep.subr.mxu0 %v76
    %1288 = vmatpush1.msra.mxu0 %v75
    %1289 = vmatprep.subr.mxu0 %v72
    %1290 = vmatpush1.msra.mxu0 %v71
    %1291 = vmatprep.subr.mxu0 %v68
    %1292 = vmatpush1.msra.mxu0 %v67
    %1293 = vmatprep.subr.mxu0 %v64
    %1294 = vmatpush1.msra.mxu0 %v63
    %1295 = vmatprep.subr.mxu0 %v60
    %1296 = vmatpush1.msra.mxu0 %v59
    %1297 = vmatprep.subr.mxu0 %v56
    %1298 = vmatpush1.msra.mxu0 %v55
    %1299 = vmatprep.subr.mxu0 %v52
    %1300 = vmatpush1.msra.mxu0 %v51
    %1301 = vmatprep.subr.mxu0 %v48
    %1302 = vmatpush1.msra.mxu0 %v47
    %1303 = vmatprep.subr.mxu0 0.0
    %1304 = vmatpush2.msra.mxu0 0.0
    %1305 = vmatprep.subr.mxu0 0.0
    %1306 = vmatpush2.msra.mxu0 0.0
    %1307 = vmatprep.subr.mxu0 0.0
    %1308 = vmatpush2.msra.mxu0 0.0
    %1309 = vmatprep.subr.mxu0 0.0
    %1310 = vmatpush2.msra.mxu0 0.0
    %1311 = vmatprep.subr.mxu0 0.0
    %1312 = vmatpush2.msra.mxu0 0.0
    %1313 = vmatprep.subr.mxu0 0.0
    %1314 = vmatpush2.msra.mxu0 0.0
    %1315 = vmatprep.subr.mxu0 0.0
    %1316 = vmatpush2.msra.mxu0 0.0
    %1317 = vmatprep.subr.mxu0 0.0
    %1318 = vmatpush2.msra.mxu0 0.0
    %1319 = vmatprep.subr.mxu0 0.0
    %1320 = vmatpush2.msra.mxu0 0.0
    %1321 = vmatprep.subr.mxu0 0.0
    %1322 = vmatpush2.msra.mxu0 0.0
    %1323 = vmatprep.subr.mxu0 0.0
    %1324 = vmatpush2.msra.mxu0 0.0
    %1325 = vmatprep.subr.mxu0 0.0
    %1326 = vmatpush2.msra.mxu0 0.0
    %1327 = vmatprep.subr.mxu0 0.0
    %1328 = vmatpush2.msra.mxu0 0.0
    %1329 = vmatprep.subr.mxu0 0.0
    %1330 = vmatpush2.msra.mxu0 0.0
    %1331 = vmatprep.subr.mxu0 0.0
    %1332 = vmatpush2.msra.mxu0 0.0
    %1333 = vmatprep.subr.mxu0 0.0
    %1334 = vmatpush2.msra.mxu0 0.0
    %1335 = vmatprep.mubr.f32.mxu0 0.0
    %1336 = vmatmul.mubr.f32.gmra.mxu0 %v1193
    %v1337 = vpop.f32.mrf.mxu0
    %v1338 = vadd.f32 0.0, %v1337
    %v1339 = vpop.f32.mrf.mxu0
    %v1340 = vadd.f32 0.0, %v1339
    %1341 = vdwg.mxu0
    %v1342 = vadd.f32 %v1196, %v1267
    %v1343 = vadd.f32 %v1197, %v1269
    %v1344 = vadd.f32 %v1198, %v1338
    %v1345 = vadd.f32 %v1199, %v1340
    %v1346 = vxor.u32 %v1342, 2147483648
    %v1347 = vmul.f32 %v1346, 1.442695
    %v1348 = vpow.pop %v1347
    %v1349 = vadd.f32 %v1348, 1.0
    %v1350 = vrcp.pop %v1349
    %v1351 = vmul.f32 1.0, %v1350
    %v1352 = vxor.u32 %v1343, 2147483648
    %v1353 = vmul.f32 %v1352, 1.442695
    %v1354 = vpow.pop %v1353
    %v1355 = vadd.f32 %v1354, 1.0
    %v1356 = vrcp.pop %v1355
    %v1357 = vmul.f32 1.0, %v1356
    %v1358 = vtanh.pop %v1344
    %v1359 = vxor.u32 %v1345, 2147483648
    %v1360 = vmul.f32 %v1359, 1.442695
    %v1361 = vpow.pop %v1360
    %v1362 = vadd.f32 %v1361, 1.0
    %v1363 = vrcp.pop %v1362
    %v1364 = vmul.f32 1.0, %v1363
    %v1365 = vmul.f32 %v1357, %v1194
    %v1366 = vmul.f32 %v1351, %v1358
    %v1367 = vadd.f32 %v1365, %v1366
    %v1368 = vtanh.pop %v1367
    %v1369 = vmul.f32 %v1364, %v1368
    %1370 = vst [vmem:[#allocation4] sm:$0xff] %v1367
    %1371 = vst [vmem:[#allocation3] sm:$0xff] %v1369
    %s1372 = scalar_lea.vmem [#allocation9], 48
    %1373 = vst [vmem:[%s1372] sm:$0xff] %v1369
    %v1374 = vld [vmem:[#allocation3] sm:$0xff]
    %v1375 = vld [vmem:[#allocation4] sm:$0xff]
    %s1376 = scalar_lea.vmem [#allocation6], 224
    %v1377 = vld [vmem:[%s1376] sm:$0xff]
    %v1378 = vld [vmem:[%s1376 + $0x8] sm:$0xff]
    %v1379 = vld [vmem:[%s1376 + $0x10] sm:$0xff]
    %v1380 = vld [vmem:[%s1376 + $0x18] sm:$0xff]
    %1381 = vmatprep.subr.mxu0 %v106
    %1382 = vmatpush1.msra.mxu0 %v105
    %1383 = vmatprep.subr.mxu0 %v102
    %1384 = vmatpush1.msra.mxu0 %v101
    %1385 = vmatprep.subr.mxu0 %v98
    %1386 = vmatpush1.msra.mxu0 %v97
    %1387 = vmatprep.subr.mxu0 %v94
    %1388 = vmatpush1.msra.mxu0 %v93
    %1389 = vmatprep.subr.mxu0 %v90
    %1390 = vmatpush1.msra.mxu0 %v89
    %1391 = vmatprep.subr.mxu0 %v86
    %1392 = vmatpush1.msra.mxu0 %v85
    %1393 = vmatprep.subr.mxu0 %v82
    %1394 = vmatpush1.msra.mxu0 %v81
    %1395 = vmatprep.subr.mxu0 %v78
    %1396 = vmatpush1.msra.mxu0 %v77
    %1397 = vmatprep.subr.mxu0 %v74
    %1398 = vmatpush1.msra.mxu0 %v73
    %1399 = vmatprep.subr.mxu0 %v70
    %1400 = vmatpush1.msra.mxu0 %v69
    %1401 = vmatprep.subr.mxu0 %v66
    %1402 = vmatpush1.msra.mxu0 %v65
    %1403 = vmatprep.subr.mxu0 %v62
    %1404 = vmatpush1.msra.mxu0 %v61
    %1405 = vmatprep.subr.mxu0 %v58
    %1406 = vmatpush1.msra.mxu0 %v57
    %1407 = vmatprep.subr.mxu0 %v54
    %1408 = vmatpush1.msra.mxu0 %v53
    %1409 = vmatprep.subr.mxu0 %v50
    %1410 = vmatpush1.msra.mxu0 %v49
    %1411 = vmatprep.subr.mxu0 %v46
    %1412 = vmatpush1.msra.mxu0 %v45
    %1413 = vmatprep.subr.mxu0 0.0
    %1414 = vmatpush2.msra.mxu0 0.0
    %1415 = vmatprep.subr.mxu0 0.0
    %1416 = vmatpush2.msra.mxu0 0.0
    %1417 = vmatprep.subr.mxu0 0.0
    %1418 = vmatpush2.msra.mxu0 0.0
    %1419 = vmatprep.subr.mxu0 0.0
    %1420 = vmatpush2.msra.mxu0 0.0
    %1421 = vmatprep.subr.mxu0 0.0
    %1422 = vmatpush2.msra.mxu0 0.0
    %1423 = vmatprep.subr.mxu0 0.0
    %1424 = vmatpush2.msra.mxu0 0.0
    %1425 = vmatprep.subr.mxu0 0.0
    %1426 = vmatpush2.msra.mxu0 0.0
    %1427 = vmatprep.subr.mxu0 0.0
    %1428 = vmatpush2.msra.mxu0 0.0
    %1429 = vmatprep.subr.mxu0 0.0
    %1430 = vmatpush2.msra.mxu0 0.0
    %1431 = vmatprep.subr.mxu0 0.0
    %1432 = vmatpush2.msra.mxu0 0.0
    %1433 = vmatprep.subr.mxu0 0.0
    %1434 = vmatpush2.msra.mxu0 0.0
    %1435 = vmatprep.subr.mxu0 0.0
    %1436 = vmatpush2.msra.mxu0 0.0
    %1437 = vmatprep.subr.mxu0 0.0
    %1438 = vmatpush2.msra.mxu0 0.0
    %1439 = vmatprep.subr.mxu0 0.0
    %1440 = vmatpush2.msra.mxu0 0.0
    %1441 = vmatprep.subr.mxu0 0.0
    %1442 = vmatpush2.msra.mxu0 0.0
    %1443 = vmatprep.subr.mxu0 0.0
    %1444 = vmatpush2.msra.mxu0 0.0
    %1445 = vmatprep.mubr.f32.mxu0 0.0
    %1446 = vmatmul.mubr.f32.gmra.mxu0 %v1374
    %v1447 = vpop.f32.mrf.mxu0
    %v1448 = vadd.f32 0.0, %v1447
    %v1449 = vpop.f32.mrf.mxu0
    %v1450 = vadd.f32 0.0, %v1449
    %1451 = vdwg.mxu0
    %1452 = vmatprep.subr.mxu0 %v108
    %1453 = vmatpush1.msra.mxu0 %v107
    %1454 = vmatprep.subr.mxu0 %v104
    %1455 = vmatpush1.msra.mxu0 %v103
    %1456 = vmatprep.subr.mxu0 %v100
    %1457 = vmatpush1.msra.mxu0 %v99
    %1458 = vmatprep.subr.mxu0 %v96
    %1459 = vmatpush1.msra.mxu0 %v95
    %1460 = vmatprep.subr.mxu0 %v92
    %1461 = vmatpush1.msra.mxu0 %v91
    %1462 = vmatprep.subr.mxu0 %v88
    %1463 = vmatpush1.msra.mxu0 %v87
    %1464 = vmatprep.subr.mxu0 %v84
    %1465 = vmatpush1.msra.mxu0 %v83
    %1466 = vmatprep.subr.mxu0 %v80
    %1467 = vmatpush1.msra.mxu0 %v79
    %1468 = vmatprep.subr.mxu0 %v76
    %1469 = vmatpush1.msra.mxu0 %v75
    %1470 = vmatprep.subr.mxu0 %v72
    %1471 = vmatpush1.msra.mxu0 %v71
    %1472 = vmatprep.subr.mxu0 %v68
    %1473 = vmatpush1.msra.mxu0 %v67
    %1474 = vmatprep.subr.mxu0 %v64
    %1475 = vmatpush1.msra.mxu0 %v63
    %1476 = vmatprep.subr.mxu0 %v60
    %1477 = vmatpush1.msra.mxu0 %v59
    %1478 = vmatprep.subr.mxu0 %v56
    %1479 = vmatpush1.msra.mxu0 %v55
    %1480 = vmatprep.subr.mxu0 %v52
    %1481 = vmatpush1.msra.mxu0 %v51
    %1482 = vmatprep.subr.mxu0 %v48
    %1483 = vmatpush1.msra.mxu0 %v47
    %1484 = vmatprep.subr.mxu0 0.0
    %1485 = vmatpush2.msra.mxu0 0.0
    %1486 = vmatprep.subr.mxu0 0.0
    %1487 = vmatpush2.msra.mxu0 0.0
    %1488 = vmatprep.subr.mxu0 0.0
    %1489 = vmatpush2.msra.mxu0 0.0
    %1490 = vmatprep.subr.mxu0 0.0
    %1491 = vmatpush2.msra.mxu0 0.0
    %1492 = vmatprep.subr.mxu0 0.0
    %1493 = vmatpush2.msra.mxu0 0.0
    %1494 = vmatprep.subr.mxu0 0.0
    %1495 = vmatpush2.msra.mxu0 0.0
    %1496 = vmatprep.subr.mxu0 0.0
    %1497 = vmatpush2.msra.mxu0 0.0
    %1498 = vmatprep.subr.mxu0 0.0
    %1499 = vmatpush2.msra.mxu0 0.0
    %1500 = vmatprep.subr.mxu0 0.0
    %1501 = vmatpush2.msra.mxu0 0.0
    %1502 = vmatprep.subr.mxu0 0.0
    %1503 = vmatpush2.msra.mxu0 0.0
    %1504 = vmatprep.subr.mxu0 0.0
    %1505 = vmatpush2.msra.mxu0 0.0
    %1506 = vmatprep.subr.mxu0 0.0
    %1507 = vmatpush2.msra.mxu0 0.0
    %1508 = vmatprep.subr.mxu0 0.0
    %1509 = vmatpush2.msra.mxu0 0.0
    %1510 = vmatprep.subr.mxu0 0.0
    %1511 = vmatpush2.msra.mxu0 0.0
    %1512 = vmatprep.subr.mxu0 0.0
    %1513 = vmatpush2.msra.mxu0 0.0
    %1514 = vmatprep.subr.mxu0 0.0
    %1515 = vmatpush2.msra.mxu0 0.0
    %1516 = vmatprep.mubr.f32.mxu0 0.0
    %1517 = vmatmul.mubr.f32.gmra.mxu0 %v1374
    %v1518 = vpop.f32.mrf.mxu0
    %v1519 = vadd.f32 0.0, %v1518
    %v1520 = vpop.f32.mrf.mxu0
    %v1521 = vadd.f32 0.0, %v1520
    %1522 = vdwg.mxu0
    %v1523 = vadd.f32 %v1377, %v1448
    %v1524 = vadd.f32 %v1378, %v1450
    %v1525 = vadd.f32 %v1379, %v1519
    %v1526 = vadd.f32 %v1380, %v1521
    %v1527 = vxor.u32 %v1523, 2147483648
    %v1528 = vmul.f32 %v1527, 1.442695
    %v1529 = vpow.pop %v1528
    %v1530 = vadd.f32 %v1529, 1.0
    %v1531 = vrcp.pop %v1530
    %v1532 = vmul.f32 1.0, %v1531
    %v1533 = vxor.u32 %v1524, 2147483648
    %v1534 = vmul.f32 %v1533, 1.442695
    %v1535 = vpow.pop %v1534
    %v1536 = vadd.f32 %v1535, 1.0
    %v1537 = vrcp.pop %v1536
    %v1538 = vmul.f32 1.0, %v1537
    %v1539 = vtanh.pop %v1525
    %v1540 = vxor.u32 %v1526, 2147483648
    %v1541 = vmul.f32 %v1540, 1.442695
    %v1542 = vpow.pop %v1541
    %v1543 = vadd.f32 %v1542, 1.0
    %v1544 = vrcp.pop %v1543
    %v1545 = vmul.f32 1.0, %v1544
    %v1546 = vmul.f32 %v1538, %v1375
    %v1547 = vmul.f32 %v1532, %v1539
    %v1548 = vadd.f32 %v1546, %v1547
    %v1549 = vtanh.pop %v1548
    %v1550 = vmul.f32 %v1545, %v1549
    %1551 = vst [vmem:[#allocation4] sm:$0xff] %v1548
    %1552 = vst [vmem:[#allocation3] sm:$0xff] %v1550
    %s1553 = scalar_lea.vmem [#allocation9], 56
    %1554 = vst [vmem:[%s1553] sm:$0xff] %v1550
    // Predicated region
    $region18: #{tpu_custom_call.1} parent=1 // pred_check
      _
    $region19: #{tpu_custom_call.1} parent=1 // pred_check_branch
      %1556 = sbr.rel (0) target = $region21
    $region20: #{tpu_custom_call.1} parent=1 // pred_region
      %s1558 = ssub.s32 1024, 1024
      %1559 = vsyncadd [#allocation8], %s1558
      %s1560 = sshll.u32 [#allocation9], 4
      %s1561 = int_to_ptr.vmem [resolvable:$true] %s1560
      %1566 = dma.vmem_to_hbm [thread:$0]  %s1561, 1024, %s2, [#allocation8], 128, 128, 8
    $region21: #{tpu_custom_call.1} parent=1 // pred_fallthru
      _
    // Predicated region
    $region22: #{tpu_custom_call.1} parent=1 // pred_check
      _
    $region23: #{tpu_custom_call.1} parent=1 // pred_check_branch
      %1568 = sbr.rel (0) target = $region25
    $region24: #{tpu_custom_call.1} parent=1 // pred_region
      %1569 = dma.done [#allocation8], 1024
    $region25: #{tpu_custom_call.1} parent=1 // pred_fallthru
      _
    %1570 = vsyncpa [#allocation7], 1
    %1571 = vsyncpa [#allocation8], 1
  %1572 = vsyncmov [#allocation5]
  %s1573 = vpop.sfrf %1572
  %p1574 = scmp.eq.s32.totalorder %s1573, 0
  %p1575 = pneg %p1574
  %1577 = shalt.err (%p1575)

</llo_original>
